<compile_context>
chip_gen: v5e
topology: v5e:2x2
jax: 0.10.0
libtpu: 0.0.40
codegen_flags: <defaults>
</compile_context>

<pallas_src>
import functools

import jax
import jax.numpy as jnp
from jax.experimental import pallas as pl
from jax.experimental.pallas import tpu as pltpu

BN_EPS = 1e-5  # torch BatchNorm default


def _irblock_kernel(x_ref, mask_ref, w1_ref, bias1_ref, w2_ref, b2_ref,
                    sew1t_ref, seb1_ref, sew2_ref, seb2_ref, scal_ref,
                    out_ref, *, shifts):
    nb = x_ref.shape[0]                  # samples handled this grid step (static)
    a_prelu = scal_ref[0]                # shared nn.PReLU() parameter
    a_se = scal_ref[1]                   # SEBlock's nn.PReLU() parameter

    def prelu(v, a):
        return jnp.where(v >= 0.0, v, a * v)

    masks = mask_ref[...]                # (9, 1, HW) f32, loaded once
    w1 = w1_ref[...]                     # (C,  9C) bf16
    w2 = w2_ref[...]                     # (P,  9C) bf16
    bias1 = bias1_ref[...]               # (C,  HW) f32
    b2 = b2_ref[...]                     # (P,  1 ) f32

    def im2col(h):
        # h: (C, HW) f32 -> (9C, HW) bf16; K layout = tap (ky*3+kx) major, channel minor.
        cols = []
        for t, shift in enumerate(shifts):
            if shift == 0:               # centre tap: mask is all-ones
                cols.append(h)
            else:
                cols.append(pltpu.roll(h, shift, axis=1) * masks[t])
        return jnp.concatenate(cols, axis=0).astype(jnp.bfloat16)

    for s in range(nb):                  # static unroll over samples in this block
        x_s = x_ref[s]                   # (C, HW) original input == residual

        # conv1 with bn0/bn1 folded into weights + boundary-aware bias map, PReLU
        h = jnp.dot(w1, im2col(x_s), preferred_element_type=jnp.float32)
        h = prelu(h + bias1, a_prelu)

        # conv2 with bn2 scale folded into weights, per-channel shift
        h = jnp.dot(w2, im2col(h), preferred_element_type=jnp.float32) + b2

        # SEBlock: global avg pool -> Linear -> PReLU -> Linear -> Sigmoid -> scale
        pooled = jnp.mean(h, axis=1, keepdims=True)                      # (P, 1)
        z1 = jnp.sum(sew1t_ref[...] * pooled, axis=0, keepdims=True)     # (1, R)
        z1 = prelu(z1 + seb1_ref[...], a_se)
        z2 = jnp.sum(sew2_ref[...] * z1, axis=1, keepdims=True)          # (P, 1)
        z2 = z2 + seb2_ref[...]
        gate = pl.reciprocal(1.0 + jnp.exp(-z2), approx=True)            # sigmoid

        # residual add (downsample is None) + final PReLU (shared parameter)
        out_ref[s] = prelu(h * gate + x_s, a_prelu)


def prepare_params(raw, H, W):
    """One-time param prep: fold BNs into conv weights / bias map, build masks."""
    f32 = jnp.float32
    HW = H * W

    def bn_fold(prefix):
        scale = raw[f"{prefix}_gamma"] / jnp.sqrt(raw[f"{prefix}_rv"] + BN_EPS)
        shift = raw[f"{prefix}_beta"] - raw[f"{prefix}_rm"] * scale
        return scale.astype(f32), shift.astype(f32)

    def flatten(w):
        # (Cout, Cin, 3, 3) -> (Cout, 9*Cin); K index = (ky*3+kx)*Cin + c
        co, ci, kh, kw = w.shape
        return jnp.transpose(w, (0, 2, 3, 1)).reshape(co, kh * kw * ci)

    s0, b0 = bn_fold("bn0")
    s1, b1 = bn_fold("bn1")
    s2, b2 = bn_fold("bn2")

    w1 = raw["conv1_w"].astype(f32)                     # (C, C, 3, 3)
    w2 = raw["conv2_w"].astype(f32)                     # (P, C, 3, 3)
    C = w1.shape[1]
    P = w2.shape[0]

    # Fold bn0 scale into conv1's input channels and bn1 scale into its output
    # channels.  conv1's zero padding applies to bn0(x), so bn0's shift turns
    # into a boundary-aware per-position bias map, computed once here.
    w1_full = w1 * s0[None, :, None, None] * s1[:, None, None, None]
    b0_img = jnp.broadcast_to(b0[None, :, None, None], (1, C, H, W))
    b0_map = jax.lax.conv_general_dilated(
        b0_img, w1, window_strides=(1, 1), padding=((1, 1), (1, 1)),
        dimension_numbers=("NCHW", "OIHW", "NCHW"),
        precision=jax.lax.Precision.HIGHEST)[0].reshape(C, HW)
    bias1 = s1[:, None] * b0_map + b1[:, None]          # (C, HW)

    w2_full = w2 * s2[:, None, None, None]

    # Boundary-validity masks for the 9 conv taps (tap index = ky*3 + kx).
    idx = jnp.arange(HW)
    xi, yi = idx % W, idx // W
    masks = []
    for ky in range(3):
        for kx in range(3):
            dy, dx = ky - 1, kx - 1
            valid = ((xi + dx >= 0) & (xi + dx < W) &
                     (yi + dy >= 0) & (yi + dy < H))
            masks.append(valid.astype(f32))
    masks = jnp.stack(masks).reshape(9, 1, HW)

    R = raw["se_w1"].shape[0]
    return dict(
        w1=flatten(w1_full).astype(jnp.bfloat16),       # (C, 9C) bf16 MXU operand
        bias1=bias1,                                    # (C, HW)
        w2=flatten(w2_full).astype(jnp.bfloat16),       # (P, 9C)
        b2=b2[:, None],                                 # (P, 1)
        masks=masks,                                    # (9, 1, HW)
        se_w1t=jnp.transpose(raw["se_w1"]).astype(f32),  # (P, R)
        se_b1=raw["se_b1"].reshape(1, R).astype(f32),
        se_w2=raw["se_w2"].astype(f32),                  # (P, R)
        se_b2=raw["se_b2"].reshape(P, 1).astype(f32),
        scalars=jnp.stack([jnp.asarray(raw["prelu_a"], f32),
                           jnp.asarray(raw["se_prelu_a"], f32)]).reshape(2),
    )


def irblock_forward(x, p, samples_per_step=None):
    B, C, H, W = x.shape
    HW = H * W
    P = p["w2"].shape[0]
    # nb samples per grid step.  Default nb=B (amortize per-step overhead on
    # v5e/v6e's single TensorCore); on v7x pass samples_per_step=B//2 so the
    # "parallel" grid axis keeps both TensorCores busy.
    nb = B if samples_per_step is None else samples_per_step
    assert B % nb == 0

    # Lane-roll amounts for the 9 taps: result[i] = h[i + dy*W + dx].
    shifts = tuple(int((-((ky - 1) * W + (kx - 1))) % HW)
                   for ky in range(3) for kx in range(3))

    xf = x.reshape(B, C, HW).astype(jnp.float32)

    def full(a):
        return pl.BlockSpec(a.shape, lambda b: (0,) * a.ndim)

    smem = pl.BlockSpec(memory_space=pltpu.MemorySpace.SMEM)

    out = pl.pallas_call(
        functools.partial(_irblock_kernel, shifts=shifts),
        out_shape=jax.ShapeDtypeStruct((B, P, HW), jnp.float32),
        grid=(B // nb,),
        in_specs=[
            pl.BlockSpec((nb, C, HW), lambda b: (b, 0, 0)),   # x (nb samples)
            full(p["masks"]),                                 # tap masks
            full(p["w1"]), full(p["bias1"]),                  # conv1 (folded)
            full(p["w2"]), full(p["b2"]),                     # conv2 (folded)
            full(p["se_w1t"]), full(p["se_b1"]),              # SE fc1 (w^T, b)
            full(p["se_w2"]), full(p["se_b2"]),               # SE fc2 (w, b)
            smem,                                             # [prelu_a, se_prelu_a]
        ],
        out_specs=pl.BlockSpec((nb, P, HW), lambda b: (b, 0, 0)),
        compiler_params=pltpu.CompilerParams(
            dimension_semantics=("parallel",)),
    )(xf, p["masks"], p["w1"], p["bias1"], p["w2"], p["b2"],
      p["se_w1t"], p["se_b1"], p["se_w2"], p["se_b2"], p["scalars"])
    return out.reshape(B, P, H, W)


def irblock_reference(x, raw):
    """Pure-JAX reference of the PyTorch IRBlock forward (eval mode)."""
    def bn(h, g, b, rm, rv):
        inv = 1.0 / jnp.sqrt(rv + BN_EPS)
        return ((h - rm[None, :, None, None]) * inv[None, :, None, None]
                * g[None, :, None, None] + b[None, :, None, None])

    def conv(h, w):
        return jax.lax.conv_general_dilated(
            h, w, window_strides=(1, 1), padding=((1, 1), (1, 1)),
            dimension_numbers=("NCHW", "OIHW", "NCHW"),
            precision=jax.lax.Precision.HIGHEST)

    def prelu(h, a):
        return jnp.where(h >= 0, h, a * h)

    out = bn(x, raw["bn0_gamma"], raw["bn0_beta"], raw["bn0_rm"], raw["bn0_rv"])
    out = conv(out, raw["conv1_w"])
    out = bn(out, raw["bn1_gamma"], raw["bn1_beta"], raw["bn1_rm"], raw["bn1_rv"])
    out = prelu(out, raw["prelu_a"])
    out = conv(out, raw["conv2_w"])
    out = bn(out, raw["bn2_gamma"], raw["bn2_beta"], raw["bn2_rm"], raw["bn2_rv"])
    pooled = jnp.mean(out, axis=(2, 3))                               # (B, P)
    z = pooled @ raw["se_w1"].T + raw["se_b1"]
    z = prelu(z, raw["se_prelu_a"])
    z = z @ raw["se_w2"].T + raw["se_b2"]
    gate = 1.0 / (1.0 + jnp.exp(-z))
    out = out * gate[:, :, None, None]
    out = out + x
    return prelu(out, raw["prelu_a"])


if __name__ == "__main__":
    key = jax.random.PRNGKey(0)
    # Default IRBlock config exercised by forward(): inplanes == planes,
    # stride=1, downsample=None, use_se=True, SE reduction=16.
    B, C, H, W = 2, 32, 16, 16
    R = C // 16

    ks = jax.random.split(key, 20)
    raw = {
        "bn0_gamma": 1.0 + 0.1 * jax.random.normal(ks[0], (C,), jnp.float32),
        "bn0_beta":  0.1 * jax.random.normal(ks[1], (C,), jnp.float32),
        "bn0_rm":    0.1 * jax.random.normal(ks[2], (C,), jnp.float32),
        "bn0_rv":    0.5 + jax.random.uniform(ks[3], (C,), jnp.float32),
        "conv1_w":   0.06 * jax.random.normal(ks[4], (C, C, 3, 3), jnp.float32),
        "bn1_gamma": 1.0 + 0.1 * jax.random.normal(ks[5], (C,), jnp.float32),
        "bn1_beta":  0.1 * jax.random.normal(ks[6], (C,), jnp.float32),
        "bn1_rm":    0.1 * jax.random.normal(ks[7], (C,), jnp.float32),
        "bn1_rv":    0.5 + jax.random.uniform(ks[8], (C,), jnp.float32),
        "conv2_w":   0.06 * jax.random.normal(ks[9], (C, C, 3, 3), jnp.float32),
        "bn2_gamma": 1.0 + 0.1 * jax.random.normal(ks[10], (C,), jnp.float32),
        "bn2_beta":  0.1 * jax.random.normal(ks[11], (C,), jnp.float32),
        "bn2_rm":    0.1 * jax.random.normal(ks[12], (C,), jnp.float32),
        "bn2_rv":    0.5 + jax.random.uniform(ks[13], (C,), jnp.float32),
        "prelu_a":   jnp.asarray(0.25, jnp.float32),
        "se_w1":     0.2 * jax.random.normal(ks[14], (R, C), jnp.float32),
        "se_b1":     0.1 * jax.random.normal(ks[15], (R,), jnp.float32),
        "se_prelu_a": jnp.asarray(0.25, jnp.float32),
        "se_w2":     0.2 * jax.random.normal(ks[16], (C, R), jnp.float32),
        "se_b2":     0.1 * jax.random.normal(ks[17], (C,), jnp.float32),
    }
    x = jax.random.normal(ks[18], (B, C, H, W), jnp.float32)

    params = prepare_params(raw, H, W)
    out = jax.jit(irblock_forward)(x, params)
    jax.block_until_ready(out)
    assert out.shape == (B, C, H, W), out.shape

    # Sanity check vs pure-JAX reference (tolerance absorbs bf16 MXU operands
    # and the approximate-reciprocal sigmoid).
    ref = jax.jit(irblock_reference)(x, raw)
    jax.block_until_ready(ref)
    err = float(jnp.max(jnp.abs(out - ref)))
    assert err < 5e-2, f"max abs error vs reference: {err}"

    print("KERNEL_OK")
</pallas_src>

<mosaic_0001>
module attributes {stable_mosaic.version = 11 : i64} {
  func.func @_irblock_kernel(%arg0: i32, %arg1: memref<2x32x256xf32, #tpu.memory_space<vmem>>, %arg2: memref<9x1x256xf32, #tpu.memory_space<vmem>>, %arg3: memref<32x288xbf16, #tpu.memory_space<vmem>>, %arg4: memref<32x256xf32, #tpu.memory_space<vmem>>, %arg5: memref<32x288xbf16, #tpu.memory_space<vmem>>, %arg6: memref<32x1xf32, #tpu.memory_space<vmem>>, %arg7: memref<32x2xf32, #tpu.memory_space<vmem>>, %arg8: memref<1x2xf32, #tpu.memory_space<vmem>>, %arg9: memref<32x2xf32, #tpu.memory_space<vmem>>, %arg10: memref<32x1xf32, #tpu.memory_space<vmem>>, %arg11: memref<2xf32, #tpu.memory_space<smem>>, %arg12: memref<2x32x256xf32, #tpu.memory_space<vmem>>) attributes {dimension_semantics = [#tpu.dimension_semantics<parallel>], iteration_bounds = array<i64: 1>, scalar_prefetch = 0 : i64, scratch_operands = 0 : i64, tpu.core_type = #tpu.core_type<tc>, window_params = [{transform_indices = @transform_0, window_bounds = array<i64: 2, 32, 256>}, {pipeline_mode = #tpu.pipeline_mode<synchronous>, transform_indices = @transform_1, window_bounds = array<i64: 9, 1, 256>}, {pipeline_mode = #tpu.pipeline_mode<synchronous>, transform_indices = @transform_2, window_bounds = array<i64: 32, 288>}, {pipeline_mode = #tpu.pipeline_mode<synchronous>, transform_indices = @transform_3, window_bounds = array<i64: 32, 256>}, {pipeline_mode = #tpu.pipeline_mode<synchronous>, transform_indices = @transform_4, window_bounds = array<i64: 32, 288>}, {pipeline_mode = #tpu.pipeline_mode<synchronous>, transform_indices = @transform_5, window_bounds = array<i64: 32, 1>}, {pipeline_mode = #tpu.pipeline_mode<synchronous>, transform_indices = @transform_6, window_bounds = array<i64: 32, 2>}, {pipeline_mode = #tpu.pipeline_mode<synchronous>, transform_indices = @transform_7, window_bounds = array<i64: 1, 2>}, {pipeline_mode = #tpu.pipeline_mode<synchronous>, transform_indices = @transform_8, window_bounds = array<i64: 32, 2>}, {pipeline_mode = #tpu.pipeline_mode<synchronous>, transform_indices = @transform_9, window_bounds = array<i64: 32, 1>}, {transform_indices = @transform_10, window_bounds = array<i64: 2>}, {transform_indices = @transform_11, window_bounds = array<i64: 2, 32, 256>}]} {
    %c0 = arith.constant 0 : index
    %0 = memref.load %arg11[%c0] : memref<2xf32, #tpu.memory_space<smem>>
    %c1 = arith.constant 1 : index
    %1 = memref.load %arg11[%c1] : memref<2xf32, #tpu.memory_space<smem>>
    %c0_0 = arith.constant 0 : index
    %c0_1 = arith.constant 0 : index
    %c0_2 = arith.constant 0 : index
    %2 = vector.load %arg2[%c0_0, %c0_1, %c0_2] : memref<9x1x256xf32, #tpu.memory_space<vmem>>, vector<9x1x256xf32>
    %c0_3 = arith.constant 0 : index
    %c0_4 = arith.constant 0 : index
    %3 = vector.load %arg3[%c0_3, %c0_4] : memref<32x288xbf16, #tpu.memory_space<vmem>>, vector<32x288xbf16>
    %c0_5 = arith.constant 0 : index
    %c0_6 = arith.constant 0 : index
    %4 = vector.load %arg5[%c0_5, %c0_6] : memref<32x288xbf16, #tpu.memory_space<vmem>>, vector<32x288xbf16>
    %c0_7 = arith.constant 0 : index
    %c0_8 = arith.constant 0 : index
    %5 = vector.load %arg4[%c0_7, %c0_8] : memref<32x256xf32, #tpu.memory_space<vmem>>, vector<32x256xf32>
    %c0_9 = arith.constant 0 : index
    %c0_10 = arith.constant 0 : index
    %6 = vector.load %arg6[%c0_9, %c0_10] : memref<32x1xf32, #tpu.memory_space<vmem>>, vector<32x1xf32>
    %c0_11 = arith.constant 0 : index
    %c0_12 = arith.constant 0 : index
    %c0_13 = arith.constant 0 : index
    %7 = vector.load %arg1[%c0_11, %c0_12, %c0_13] : memref<2x32x256xf32, #tpu.memory_space<vmem>>, vector<1x32x256xf32>
    %8 = vector.shape_cast %7 : vector<1x32x256xf32> to vector<32x256xf32>
    %c17_i32 = arith.constant 17 : i32
    %9 = tpu.dynamic_rotate %8 by %c17_i32 dim 1 : vector<32x256xf32>, i32 -> vector<32x256xf32>
    %10 = vector.extract_strided_slice %2 {offsets = [0, 0, 0], sizes = [1, 1, 256], strides = [1, 1, 1]} : vector<9x1x256xf32> to vector<1x1x256xf32>
    %11 = vector.shape_cast %10 : vector<1x1x256xf32> to vector<1x256xf32>
    %12 = vector.broadcast %11 : vector<1x256xf32> to vector<32x256xf32>
    %13 = arith.mulf %9, %12 : vector<32x256xf32>
    %c16_i32 = arith.constant 16 : i32
    %14 = tpu.dynamic_rotate %8 by %c16_i32 dim 1 : vector<32x256xf32>, i32 -> vector<32x256xf32>
    %15 = vector.extract_strided_slice %2 {offsets = [1, 0, 0], sizes = [1, 1, 256], strides = [1, 1, 1]} : vector<9x1x256xf32> to vector<1x1x256xf32>
    %16 = vector.shape_cast %15 : vector<1x1x256xf32> to vector<1x256xf32>
    %17 = vector.broadcast %16 : vector<1x256xf32> to vector<32x256xf32>
    %18 = arith.mulf %14, %17 : vector<32x256xf32>
    %c15_i32 = arith.constant 15 : i32
    %19 = tpu.dynamic_rotate %8 by %c15_i32 dim 1 : vector<32x256xf32>, i32 -> vector<32x256xf32>
    %20 = vector.extract_strided_slice %2 {offsets = [2, 0, 0], sizes = [1, 1, 256], strides = [1, 1, 1]} : vector<9x1x256xf32> to vector<1x1x256xf32>
    %21 = vector.shape_cast %20 : vector<1x1x256xf32> to vector<1x256xf32>
    %22 = vector.broadcast %21 : vector<1x256xf32> to vector<32x256xf32>
    %23 = arith.mulf %19, %22 : vector<32x256xf32>
    %c1_i32 = arith.constant 1 : i32
    %24 = tpu.dynamic_rotate %8 by %c1_i32 dim 1 : vector<32x256xf32>, i32 -> vector<32x256xf32>
    %25 = vector.extract_strided_slice %2 {offsets = [3, 0, 0], sizes = [1, 1, 256], strides = [1, 1, 1]} : vector<9x1x256xf32> to vector<1x1x256xf32>
    %26 = vector.shape_cast %25 : vector<1x1x256xf32> to vector<1x256xf32>
    %27 = vector.broadcast %26 : vector<1x256xf32> to vector<32x256xf32>
    %28 = arith.mulf %24, %27 : vector<32x256xf32>
    %c255_i32 = arith.constant 255 : i32
    %29 = tpu.dynamic_rotate %8 by %c255_i32 dim 1 : vector<32x256xf32>, i32 -> vector<32x256xf32>
    %30 = vector.extract_strided_slice %2 {offsets = [5, 0, 0], sizes = [1, 1, 256], strides = [1, 1, 1]} : vector<9x1x256xf32> to vector<1x1x256xf32>
    %31 = vector.shape_cast %30 : vector<1x1x256xf32> to vector<1x256xf32>
    %32 = vector.broadcast %31 : vector<1x256xf32> to vector<32x256xf32>
    %33 = arith.mulf %29, %32 : vector<32x256xf32>
    %c241_i32 = arith.constant 241 : i32
    %34 = tpu.dynamic_rotate %8 by %c241_i32 dim 1 : vector<32x256xf32>, i32 -> vector<32x256xf32>
    %35 = vector.extract_strided_slice %2 {offsets = [6, 0, 0], sizes = [1, 1, 256], strides = [1, 1, 1]} : vector<9x1x256xf32> to vector<1x1x256xf32>
    %36 = vector.shape_cast %35 : vector<1x1x256xf32> to vector<1x256xf32>
    %37 = vector.broadcast %36 : vector<1x256xf32> to vector<32x256xf32>
    %38 = arith.mulf %34, %37 : vector<32x256xf32>
    %c240_i32 = arith.constant 240 : i32
    %39 = tpu.dynamic_rotate %8 by %c240_i32 dim 1 : vector<32x256xf32>, i32 -> vector<32x256xf32>
    %40 = vector.extract_strided_slice %2 {offsets = [7, 0, 0], sizes = [1, 1, 256], strides = [1, 1, 1]} : vector<9x1x256xf32> to vector<1x1x256xf32>
    %41 = vector.shape_cast %40 : vector<1x1x256xf32> to vector<1x256xf32>
    %42 = vector.broadcast %41 : vector<1x256xf32> to vector<32x256xf32>
    %43 = arith.mulf %39, %42 : vector<32x256xf32>
    %c239_i32 = arith.constant 239 : i32
    %44 = tpu.dynamic_rotate %8 by %c239_i32 dim 1 : vector<32x256xf32>, i32 -> vector<32x256xf32>
    %45 = vector.extract_strided_slice %2 {offsets = [8, 0, 0], sizes = [1, 1, 256], strides = [1, 1, 1]} : vector<9x1x256xf32> to vector<1x1x256xf32>
    %46 = vector.shape_cast %45 : vector<1x1x256xf32> to vector<1x256xf32>
    %47 = vector.broadcast %46 : vector<1x256xf32> to vector<32x256xf32>
    %48 = arith.mulf %44, %47 : vector<32x256xf32>
    %49 = tpu.concatenate %13, %18, %23, %28, %8, %33, %38, %43, %48 in 0 : vector<32x256xf32>, vector<32x256xf32>, vector<32x256xf32>, vector<32x256xf32>, vector<32x256xf32>, vector<32x256xf32>, vector<32x256xf32>, vector<32x256xf32>, vector<32x256xf32> -> vector<288x256xf32>
    %50 = arith.truncf %49 : vector<288x256xf32> to vector<288x256xbf16>
    %cst = arith.constant dense<0.000000e+00> : vector<32x256xf32>
    %51 = tpu.matmul %3, %50, %cst {dimension_numbers = #tpu.dot_dimension_numbers<[1], [0], [0], [1], [0, 0, 1, 1], [], []>} : vector<32x288xbf16>, vector<288x256xbf16>, vector<32x256xf32> -> vector<32x256xf32>
    %52 = arith.addf %51, %5 : vector<32x256xf32>
    %cst_14 = arith.constant 0.000000e+00 : f32
    %53 = vector.broadcast %cst_14 : f32 to vector<32x256xf32>
    %54 = arith.cmpf oge, %52, %53 : vector<32x256xf32>
    %55 = vector.broadcast %0 : f32 to vector<32x256xf32>
    %56 = arith.mulf %55, %52 : vector<32x256xf32>
    %57 = arith.select %54, %52, %56 : vector<32x256xi1>, vector<32x256xf32>
    %c17_i32_15 = arith.constant 17 : i32
    %58 = tpu.dynamic_rotate %57 by %c17_i32_15 dim 1 : vector<32x256xf32>, i32 -> vector<32x256xf32>
    %59 = vector.extract_strided_slice %2 {offsets = [0, 0, 0], sizes = [1, 1, 256], strides = [1, 1, 1]} : vector<9x1x256xf32> to vector<1x1x256xf32>
    %60 = vector.shape_cast %59 : vector<1x1x256xf32> to vector<1x256xf32>
    %61 = vector.broadcast %60 : vector<1x256xf32> to vector<32x256xf32>
    %62 = arith.mulf %58, %61 : vector<32x256xf32>
    %c16_i32_16 = arith.constant 16 : i32
    %63 = tpu.dynamic_rotate %57 by %c16_i32_16 dim 1 : vector<32x256xf32>, i32 -> vector<32x256xf32>
    %64 = vector.extract_strided_slice %2 {offsets = [1, 0, 0], sizes = [1, 1, 256], strides = [1, 1, 1]} : vector<9x1x256xf32> to vector<1x1x256xf32>
    %65 = vector.shape_cast %64 : vector<1x1x256xf32> to vector<1x256xf32>
    %66 = vector.broadcast %65 : vector<1x256xf32> to vector<32x256xf32>
    %67 = arith.mulf %63, %66 : vector<32x256xf32>
    %c15_i32_17 = arith.constant 15 : i32
    %68 = tpu.dynamic_rotate %57 by %c15_i32_17 dim 1 : vector<32x256xf32>, i32 -> vector<32x256xf32>
    %69 = vector.extract_strided_slice %2 {offsets = [2, 0, 0], sizes = [1, 1, 256], strides = [1, 1, 1]} : vector<9x1x256xf32> to vector<1x1x256xf32>
    %70 = vector.shape_cast %69 : vector<1x1x256xf32> to vector<1x256xf32>
    %71 = vector.broadcast %70 : vector<1x256xf32> to vector<32x256xf32>
    %72 = arith.mulf %68, %71 : vector<32x256xf32>
    %c1_i32_18 = arith.constant 1 : i32
    %73 = tpu.dynamic_rotate %57 by %c1_i32_18 dim 1 : vector<32x256xf32>, i32 -> vector<32x256xf32>
    %74 = vector.extract_strided_slice %2 {offsets = [3, 0, 0], sizes = [1, 1, 256], strides = [1, 1, 1]} : vector<9x1x256xf32> to vector<1x1x256xf32>
    %75 = vector.shape_cast %74 : vector<1x1x256xf32> to vector<1x256xf32>
    %76 = vector.broadcast %75 : vector<1x256xf32> to vector<32x256xf32>
    %77 = arith.mulf %73, %76 : vector<32x256xf32>
    %c255_i32_19 = arith.constant 255 : i32
    %78 = tpu.dynamic_rotate %57 by %c255_i32_19 dim 1 : vector<32x256xf32>, i32 -> vector<32x256xf32>
    %79 = vector.extract_strided_slice %2 {offsets = [5, 0, 0], sizes = [1, 1, 256], strides = [1, 1, 1]} : vector<9x1x256xf32> to vector<1x1x256xf32>
    %80 = vector.shape_cast %79 : vector<1x1x256xf32> to vector<1x256xf32>
    %81 = vector.broadcast %80 : vector<1x256xf32> to vector<32x256xf32>
    %82 = arith.mulf %78, %81 : vector<32x256xf32>
    %c241_i32_20 = arith.constant 241 : i32
    %83 = tpu.dynamic_rotate %57 by %c241_i32_20 dim 1 : vector<32x256xf32>, i32 -> vector<32x256xf32>
    %84 = vector.extract_strided_slice %2 {offsets = [6, 0, 0], sizes = [1, 1, 256], strides = [1, 1, 1]} : vector<9x1x256xf32> to vector<1x1x256xf32>
    %85 = vector.shape_cast %84 : vector<1x1x256xf32> to vector<1x256xf32>
    %86 = vector.broadcast %85 : vector<1x256xf32> to vector<32x256xf32>
    %87 = arith.mulf %83, %86 : vector<32x256xf32>
    %c240_i32_21 = arith.constant 240 : i32
    %88 = tpu.dynamic_rotate %57 by %c240_i32_21 dim 1 : vector<32x256xf32>, i32 -> vector<32x256xf32>
    %89 = vector.extract_strided_slice %2 {offsets = [7, 0, 0], sizes = [1, 1, 256], strides = [1, 1, 1]} : vector<9x1x256xf32> to vector<1x1x256xf32>
    %90 = vector.shape_cast %89 : vector<1x1x256xf32> to vector<1x256xf32>
    %91 = vector.broadcast %90 : vector<1x256xf32> to vector<32x256xf32>
    %92 = arith.mulf %88, %91 : vector<32x256xf32>
    %c239_i32_22 = arith.constant 239 : i32
    %93 = tpu.dynamic_rotate %57 by %c239_i32_22 dim 1 : vector<32x256xf32>, i32 -> vector<32x256xf32>
    %94 = vector.extract_strided_slice %2 {offsets = [8, 0, 0], sizes = [1, 1, 256], strides = [1, 1, 1]} : vector<9x1x256xf32> to vector<1x1x256xf32>
    %95 = vector.shape_cast %94 : vector<1x1x256xf32> to vector<1x256xf32>
    %96 = vector.broadcast %95 : vector<1x256xf32> to vector<32x256xf32>
    %97 = arith.mulf %93, %96 : vector<32x256xf32>
    %98 = tpu.concatenate %62, %67, %72, %77, %57, %82, %87, %92, %97 in 0 : vector<32x256xf32>, vector<32x256xf32>, vector<32x256xf32>, vector<32x256xf32>, vector<32x256xf32>, vector<32x256xf32>, vector<32x256xf32>, vector<32x256xf32>, vector<32x256xf32> -> vector<288x256xf32>
    %99 = arith.truncf %98 : vector<288x256xf32> to vector<288x256xbf16>
    %cst_23 = arith.constant dense<0.000000e+00> : vector<32x256xf32>
    %100 = tpu.matmul %4, %99, %cst_23 {dimension_numbers = #tpu.dot_dimension_numbers<[1], [0], [0], [1], [0, 0, 1, 1], [], []>} : vector<32x288xbf16>, vector<288x256xbf16>, vector<32x256xf32> -> vector<32x256xf32>
    %101 = vector.broadcast %6 : vector<32x1xf32> to vector<32x256xf32>
    %102 = arith.addf %100, %101 : vector<32x256xf32>
    %cst_24 = arith.constant dense<0.000000e+00> : vector<32xf32>
    %103 = vector.multi_reduction <add>, %102, %cst_24 [1] : vector<32x256xf32> to vector<32xf32>
    %104 = vector.shape_cast %103 : vector<32xf32> to vector<32x1xf32>
    %cst_25 = arith.constant 2.560000e+02 : f32
    %105 = vector.broadcast %cst_25 : f32 to vector<32x1xf32>
    %106 = arith.divf %104, %105 : vector<32x1xf32>
    %c0_26 = arith.constant 0 : index
    %c0_27 = arith.constant 0 : index
    %107 = vector.load %arg7[%c0_26, %c0_27] : memref<32x2xf32, #tpu.memory_space<vmem>>, vector<32x2xf32>
    %108 = vector.broadcast %106 : vector<32x1xf32> to vector<32x2xf32>
    %109 = arith.mulf %107, %108 : vector<32x2xf32>
    %cst_28 = arith.constant dense<0.000000e+00> : vector<2xf32>
    %110 = vector.multi_reduction <add>, %109, %cst_28 [0] : vector<32x2xf32> to vector<2xf32>
    %111 = vector.shape_cast %110 : vector<2xf32> to vector<1x2xf32>
    %c0_29 = arith.constant 0 : index
    %c0_30 = arith.constant 0 : index
    %112 = vector.load %arg8[%c0_29, %c0_30] : memref<1x2xf32, #tpu.memory_space<vmem>>, vector<1x2xf32>
    %113 = arith.addf %111, %112 : vector<1x2xf32>
    %cst_31 = arith.constant 0.000000e+00 : f32
    %114 = vector.broadcast %cst_31 : f32 to vector<1x2xf32>
    %115 = arith.cmpf oge, %113, %114 : vector<1x2xf32>
    %116 = vector.broadcast %1 : f32 to vector<1x2xf32>
    %117 = arith.mulf %116, %113 : vector<1x2xf32>
    %118 = arith.select %115, %113, %117 : vector<1x2xi1>, vector<1x2xf32>
    %c0_32 = arith.constant 0 : index
    %c0_33 = arith.constant 0 : index
    %119 = vector.load %arg9[%c0_32, %c0_33] : memref<32x2xf32, #tpu.memory_space<vmem>>, vector<32x2xf32>
    %120 = vector.broadcast %118 : vector<1x2xf32> to vector<32x2xf32>
    %121 = arith.mulf %119, %120 : vector<32x2xf32>
    %cst_34 = arith.constant dense<0.000000e+00> : vector<32xf32>
    %122 = vector.multi_reduction <add>, %121, %cst_34 [1] : vector<32x2xf32> to vector<32xf32>
    %123 = vector.shape_cast %122 : vector<32xf32> to vector<32x1xf32>
    %c0_35 = arith.constant 0 : index
    %c0_36 = arith.constant 0 : index
    %124 = vector.load %arg10[%c0_35, %c0_36] : memref<32x1xf32, #tpu.memory_space<vmem>>, vector<32x1xf32>
    %125 = arith.addf %123, %124 : vector<32x1xf32>
    %cst_37 = arith.constant 0.000000e+00 : f32
    %126 = vector.broadcast %cst_37 : f32 to vector<32x1xf32>
    %127 = arith.subf %126, %125 : vector<32x1xf32>
    %128 = math.exp %127 : vector<32x1xf32>
    %cst_38 = arith.constant 1.000000e+00 : f32
    %129 = vector.broadcast %cst_38 : f32 to vector<32x1xf32>
    %130 = arith.addf %129, %128 : vector<32x1xf32>
    %131 = tpu.reciprocal %130 {approx = true} : vector<32x1xf32> -> vector<32x1xf32>
    %132 = vector.broadcast %131 : vector<32x1xf32> to vector<32x256xf32>
    %133 = arith.mulf %102, %132 : vector<32x256xf32>
    %134 = arith.addf %133, %8 : vector<32x256xf32>
    %cst_39 = arith.constant 0.000000e+00 : f32
    %135 = vector.broadcast %cst_39 : f32 to vector<32x256xf32>
    %136 = arith.cmpf oge, %134, %135 : vector<32x256xf32>
    %137 = vector.broadcast %0 : f32 to vector<32x256xf32>
    %138 = arith.mulf %137, %134 : vector<32x256xf32>
    %139 = arith.select %136, %134, %138 : vector<32x256xi1>, vector<32x256xf32>
    %c0_40 = arith.constant 0 : index
    %c0_41 = arith.constant 0 : index
    %c0_42 = arith.constant 0 : index
    %140 = vector.load %arg12[%c0_40, %c0_41, %c0_42] : memref<2x32x256xf32, #tpu.memory_space<vmem>>, vector<1x32x256xf32>
    %141 = vector.shape_cast %140 : vector<1x32x256xf32> to vector<32x256xf32>
    %142 = vector.shape_cast %139 : vector<32x256xf32> to vector<1x32x256xf32>
    tpu.vector_store %arg12[%c0_40, %c0_41, %c0_42], %142 {strides = array<i32>} : memref<2x32x256xf32, #tpu.memory_space<vmem>>, vector<1x32x256xf32>,
    %c1_43 = arith.constant 1 : index
    %c0_44 = arith.constant 0 : index
    %c0_45 = arith.constant 0 : index
    %143 = vector.load %arg1[%c1_43, %c0_44, %c0_45] : memref<2x32x256xf32, #tpu.memory_space<vmem>>, vector<1x32x256xf32>
    %144 = vector.shape_cast %143 : vector<1x32x256xf32> to vector<32x256xf32>
    %c17_i32_46 = arith.constant 17 : i32
    %145 = tpu.dynamic_rotate %144 by %c17_i32_46 dim 1 : vector<32x256xf32>, i32 -> vector<32x256xf32>
    %146 = vector.extract_strided_slice %2 {offsets = [0, 0, 0], sizes = [1, 1, 256], strides = [1, 1, 1]} : vector<9x1x256xf32> to vector<1x1x256xf32>
    %147 = vector.shape_cast %146 : vector<1x1x256xf32> to vector<1x256xf32>
    %148 = vector.broadcast %147 : vector<1x256xf32> to vector<32x256xf32>
    %149 = arith.mulf %145, %148 : vector<32x256xf32>
    %c16_i32_47 = arith.constant 16 : i32
    %150 = tpu.dynamic_rotate %144 by %c16_i32_47 dim 1 : vector<32x256xf32>, i32 -> vector<32x256xf32>
    %151 = vector.extract_strided_slice %2 {offsets = [1, 0, 0], sizes = [1, 1, 256], strides = [1, 1, 1]} : vector<9x1x256xf32> to vector<1x1x256xf32>
    %152 = vector.shape_cast %151 : vector<1x1x256xf32> to vector<1x256xf32>
    %153 = vector.broadcast %152 : vector<1x256xf32> to vector<32x256xf32>
    %154 = arith.mulf %150, %153 : vector<32x256xf32>
    %c15_i32_48 = arith.constant 15 : i32
    %155 = tpu.dynamic_rotate %144 by %c15_i32_48 dim 1 : vector<32x256xf32>, i32 -> vector<32x256xf32>
    %156 = vector.extract_strided_slice %2 {offsets = [2, 0, 0], sizes = [1, 1, 256], strides = [1, 1, 1]} : vector<9x1x256xf32> to vector<1x1x256xf32>
    %157 = vector.shape_cast %156 : vector<1x1x256xf32> to vector<1x256xf32>
    %158 = vector.broadcast %157 : vector<1x256xf32> to vector<32x256xf32>
    %159 = arith.mulf %155, %158 : vector<32x256xf32>
    %c1_i32_49 = arith.constant 1 : i32
    %160 = tpu.dynamic_rotate %144 by %c1_i32_49 dim 1 : vector<32x256xf32>, i32 -> vector<32x256xf32>
    %161 = vector.extract_strided_slice %2 {offsets = [3, 0, 0], sizes = [1, 1, 256], strides = [1, 1, 1]} : vector<9x1x256xf32> to vector<1x1x256xf32>
    %162 = vector.shape_cast %161 : vector<1x1x256xf32> to vector<1x256xf32>
    %163 = vector.broadcast %162 : vector<1x256xf32> to vector<32x256xf32>
    %164 = arith.mulf %160, %163 : vector<32x256xf32>
    %c255_i32_50 = arith.constant 255 : i32
    %165 = tpu.dynamic_rotate %144 by %c255_i32_50 dim 1 : vector<32x256xf32>, i32 -> vector<32x256xf32>
    %166 = vector.extract_strided_slice %2 {offsets = [5, 0, 0], sizes = [1, 1, 256], strides = [1, 1, 1]} : vector<9x1x256xf32> to vector<1x1x256xf32>
    %167 = vector.shape_cast %166 : vector<1x1x256xf32> to vector<1x256xf32>
    %168 = vector.broadcast %167 : vector<1x256xf32> to vector<32x256xf32>
    %169 = arith.mulf %165, %168 : vector<32x256xf32>
    %c241_i32_51 = arith.constant 241 : i32
    %170 = tpu.dynamic_rotate %144 by %c241_i32_51 dim 1 : vector<32x256xf32>, i32 -> vector<32x256xf32>
    %171 = vector.extract_strided_slice %2 {offsets = [6, 0, 0], sizes = [1, 1, 256], strides = [1, 1, 1]} : vector<9x1x256xf32> to vector<1x1x256xf32>
    %172 = vector.shape_cast %171 : vector<1x1x256xf32> to vector<1x256xf32>
    %173 = vector.broadcast %172 : vector<1x256xf32> to vector<32x256xf32>
    %174 = arith.mulf %170, %173 : vector<32x256xf32>
    %c240_i32_52 = arith.constant 240 : i32
    %175 = tpu.dynamic_rotate %144 by %c240_i32_52 dim 1 : vector<32x256xf32>, i32 -> vector<32x256xf32>
    %176 = vector.extract_strided_slice %2 {offsets = [7, 0, 0], sizes = [1, 1, 256], strides = [1, 1, 1]} : vector<9x1x256xf32> to vector<1x1x256xf32>
    %177 = vector.shape_cast %176 : vector<1x1x256xf32> to vector<1x256xf32>
    %178 = vector.broadcast %177 : vector<1x256xf32> to vector<32x256xf32>
    %179 = arith.mulf %175, %178 : vector<32x256xf32>
    %c239_i32_53 = arith.constant 239 : i32
    %180 = tpu.dynamic_rotate %144 by %c239_i32_53 dim 1 : vector<32x256xf32>, i32 -> vector<32x256xf32>
    %181 = vector.extract_strided_slice %2 {offsets = [8, 0, 0], sizes = [1, 1, 256], strides = [1, 1, 1]} : vector<9x1x256xf32> to vector<1x1x256xf32>
    %182 = vector.shape_cast %181 : vector<1x1x256xf32> to vector<1x256xf32>
    %183 = vector.broadcast %182 : vector<1x256xf32> to vector<32x256xf32>
    %184 = arith.mulf %180, %183 : vector<32x256xf32>
    %185 = tpu.concatenate %149, %154, %159, %164, %144, %169, %174, %179, %184 in 0 : vector<32x256xf32>, vector<32x256xf32>, vector<32x256xf32>, vector<32x256xf32>, vector<32x256xf32>, vector<32x256xf32>, vector<32x256xf32>, vector<32x256xf32>, vector<32x256xf32> -> vector<288x256xf32>
    %186 = arith.truncf %185 : vector<288x256xf32> to vector<288x256xbf16>
    %cst_54 = arith.constant dense<0.000000e+00> : vector<32x256xf32>
    %187 = tpu.matmul %3, %186, %cst_54 {dimension_numbers = #tpu.dot_dimension_numbers<[1], [0], [0], [1], [0, 0, 1, 1], [], []>} : vector<32x288xbf16>, vector<288x256xbf16>, vector<32x256xf32> -> vector<32x256xf32>
    %188 = arith.addf %187, %5 : vector<32x256xf32>
    %cst_55 = arith.constant 0.000000e+00 : f32
    %189 = vector.broadcast %cst_55 : f32 to vector<32x256xf32>
    %190 = arith.cmpf oge, %188, %189 : vector<32x256xf32>
    %191 = vector.broadcast %0 : f32 to vector<32x256xf32>
    %192 = arith.mulf %191, %188 : vector<32x256xf32>
    %193 = arith.select %190, %188, %192 : vector<32x256xi1>, vector<32x256xf32>
    %c17_i32_56 = arith.constant 17 : i32
    %194 = tpu.dynamic_rotate %193 by %c17_i32_56 dim 1 : vector<32x256xf32>, i32 -> vector<32x256xf32>
    %195 = vector.extract_strided_slice %2 {offsets = [0, 0, 0], sizes = [1, 1, 256], strides = [1, 1, 1]} : vector<9x1x256xf32> to vector<1x1x256xf32>
    %196 = vector.shape_cast %195 : vector<1x1x256xf32> to vector<1x256xf32>
    %197 = vector.broadcast %196 : vector<1x256xf32> to vector<32x256xf32>
    %198 = arith.mulf %194, %197 : vector<32x256xf32>
    %c16_i32_57 = arith.constant 16 : i32
    %199 = tpu.dynamic_rotate %193 by %c16_i32_57 dim 1 : vector<32x256xf32>, i32 -> vector<32x256xf32>
    %200 = vector.extract_strided_slice %2 {offsets = [1, 0, 0], sizes = [1, 1, 256], strides = [1, 1, 1]} : vector<9x1x256xf32> to vector<1x1x256xf32>
    %201 = vector.shape_cast %200 : vector<1x1x256xf32> to vector<1x256xf32>
    %202 = vector.broadcast %201 : vector<1x256xf32> to vector<32x256xf32>
    %203 = arith.mulf %199, %202 : vector<32x256xf32>
    %c15_i32_58 = arith.constant 15 : i32
    %204 = tpu.dynamic_rotate %193 by %c15_i32_58 dim 1 : vector<32x256xf32>, i32 -> vector<32x256xf32>
    %205 = vector.extract_strided_slice %2 {offsets = [2, 0, 0], sizes = [1, 1, 256], strides = [1, 1, 1]} : vector<9x1x256xf32> to vector<1x1x256xf32>
    %206 = vector.shape_cast %205 : vector<1x1x256xf32> to vector<1x256xf32>
    %207 = vector.broadcast %206 : vector<1x256xf32> to vector<32x256xf32>
    %208 = arith.mulf %204, %207 : vector<32x256xf32>
    %c1_i32_59 = arith.constant 1 : i32
    %209 = tpu.dynamic_rotate %193 by %c1_i32_59 dim 1 : vector<32x256xf32>, i32 -> vector<32x256xf32>
    %210 = vector.extract_strided_slice %2 {offsets = [3, 0, 0], sizes = [1, 1, 256], strides = [1, 1, 1]} : vector<9x1x256xf32> to vector<1x1x256xf32>
    %211 = vector.shape_cast %210 : vector<1x1x256xf32> to vector<1x256xf32>
    %212 = vector.broadcast %211 : vector<1x256xf32> to vector<32x256xf32>
    %213 = arith.mulf %209, %212 : vector<32x256xf32>
    %c255_i32_60 = arith.constant 255 : i32
    %214 = tpu.dynamic_rotate %193 by %c255_i32_60 dim 1 : vector<32x256xf32>, i32 -> vector<32x256xf32>
    %215 = vector.extract_strided_slice %2 {offsets = [5, 0, 0], sizes = [1, 1, 256], strides = [1, 1, 1]} : vector<9x1x256xf32> to vector<1x1x256xf32>
    %216 = vector.shape_cast %215 : vector<1x1x256xf32> to vector<1x256xf32>
    %217 = vector.broadcast %216 : vector<1x256xf32> to vector<32x256xf32>
    %218 = arith.mulf %214, %217 : vector<32x256xf32>
    %c241_i32_61 = arith.constant 241 : i32
    %219 = tpu.dynamic_rotate %193 by %c241_i32_61 dim 1 : vector<32x256xf32>, i32 -> vector<32x256xf32>
    %220 = vector.extract_strided_slice %2 {offsets = [6, 0, 0], sizes = [1, 1, 256], strides = [1, 1, 1]} : vector<9x1x256xf32> to vector<1x1x256xf32>
    %221 = vector.shape_cast %220 : vector<1x1x256xf32> to vector<1x256xf32>
    %222 = vector.broadcast %221 : vector<1x256xf32> to vector<32x256xf32>
    %223 = arith.mulf %219, %222 : vector<32x256xf32>
    %c240_i32_62 = arith.constant 240 : i32
    %224 = tpu.dynamic_rotate %193 by %c240_i32_62 dim 1 : vector<32x256xf32>, i32 -> vector<32x256xf32>
    %225 = vector.extract_strided_slice %2 {offsets = [7, 0, 0], sizes = [1, 1, 256], strides = [1, 1, 1]} : vector<9x1x256xf32> to vector<1x1x256xf32>
    %226 = vector.shape_cast %225 : vector<1x1x256xf32> to vector<1x256xf32>
    %227 = vector.broadcast %226 : vector<1x256xf32> to vector<32x256xf32>
    %228 = arith.mulf %224, %227 : vector<32x256xf32>
    %c239_i32_63 = arith.constant 239 : i32
    %229 = tpu.dynamic_rotate %193 by %c239_i32_63 dim 1 : vector<32x256xf32>, i32 -> vector<32x256xf32>
    %230 = vector.extract_strided_slice %2 {offsets = [8, 0, 0], sizes = [1, 1, 256], strides = [1, 1, 1]} : vector<9x1x256xf32> to vector<1x1x256xf32>
    %231 = vector.shape_cast %230 : vector<1x1x256xf32> to vector<1x256xf32>
    %232 = vector.broadcast %231 : vector<1x256xf32> to vector<32x256xf32>
    %233 = arith.mulf %229, %232 : vector<32x256xf32>
    %234 = tpu.concatenate %198, %203, %208, %213, %193, %218, %223, %228, %233 in 0 : vector<32x256xf32>, vector<32x256xf32>, vector<32x256xf32>, vector<32x256xf32>, vector<32x256xf32>, vector<32x256xf32>, vector<32x256xf32>, vector<32x256xf32>, vector<32x256xf32> -> vector<288x256xf32>
    %235 = arith.truncf %234 : vector<288x256xf32> to vector<288x256xbf16>
    %cst_64 = arith.constant dense<0.000000e+00> : vector<32x256xf32>
    %236 = tpu.matmul %4, %235, %cst_64 {dimension_numbers = #tpu.dot_dimension_numbers<[1], [0], [0], [1], [0, 0, 1, 1], [], []>} : vector<32x288xbf16>, vector<288x256xbf16>, vector<32x256xf32> -> vector<32x256xf32>
    %237 = vector.broadcast %6 : vector<32x1xf32> to vector<32x256xf32>
    %238 = arith.addf %236, %237 : vector<32x256xf32>
    %cst_65 = arith.constant dense<0.000000e+00> : vector<32xf32>
    %239 = vector.multi_reduction <add>, %238, %cst_65 [1] : vector<32x256xf32> to vector<32xf32>
    %240 = vector.shape_cast %239 : vector<32xf32> to vector<32x1xf32>
    %cst_66 = arith.constant 2.560000e+02 : f32
    %241 = vector.broadcast %cst_66 : f32 to vector<32x1xf32>
    %242 = arith.divf %240, %241 : vector<32x1xf32>
    %c0_67 = arith.constant 0 : index
    %c0_68 = arith.constant 0 : index
    %243 = vector.load %arg7[%c0_67, %c0_68] : memref<32x2xf32, #tpu.memory_space<vmem>>, vector<32x2xf32>
    %244 = vector.broadcast %242 : vector<32x1xf32> to vector<32x2xf32>
    %245 = arith.mulf %243, %244 : vector<32x2xf32>
    %cst_69 = arith.constant dense<0.000000e+00> : vector<2xf32>
    %246 = vector.multi_reduction <add>, %245, %cst_69 [0] : vector<32x2xf32> to vector<2xf32>
    %247 = vector.shape_cast %246 : vector<2xf32> to vector<1x2xf32>
    %c0_70 = arith.constant 0 : index
    %c0_71 = arith.constant 0 : index
    %248 = vector.load %arg8[%c0_70, %c0_71] : memref<1x2xf32, #tpu.memory_space<vmem>>, vector<1x2xf32>
    %249 = arith.addf %247, %248 : vector<1x2xf32>
    %cst_72 = arith.constant 0.000000e+00 : f32
    %250 = vector.broadcast %cst_72 : f32 to vector<1x2xf32>
    %251 = arith.cmpf oge, %249, %250 : vector<1x2xf32>
    %252 = vector.broadcast %1 : f32 to vector<1x2xf32>
    %253 = arith.mulf %252, %249 : vector<1x2xf32>
    %254 = arith.select %251, %249, %253 : vector<1x2xi1>, vector<1x2xf32>
    %c0_73 = arith.constant 0 : index
    %c0_74 = arith.constant 0 : index
    %255 = vector.load %arg9[%c0_73, %c0_74] : memref<32x2xf32, #tpu.memory_space<vmem>>, vector<32x2xf32>
    %256 = vector.broadcast %254 : vector<1x2xf32> to vector<32x2xf32>
    %257 = arith.mulf %255, %256 : vector<32x2xf32>
    %cst_75 = arith.constant dense<0.000000e+00> : vector<32xf32>
    %258 = vector.multi_reduction <add>, %257, %cst_75 [1] : vector<32x2xf32> to vector<32xf32>
    %259 = vector.shape_cast %258 : vector<32xf32> to vector<32x1xf32>
    %c0_76 = arith.constant 0 : index
    %c0_77 = arith.constant 0 : index
    %260 = vector.load %arg10[%c0_76, %c0_77] : memref<32x1xf32, #tpu.memory_space<vmem>>, vector<32x1xf32>
    %261 = arith.addf %259, %260 : vector<32x1xf32>
    %cst_78 = arith.constant 0.000000e+00 : f32
    %262 = vector.broadcast %cst_78 : f32 to vector<32x1xf32>
    %263 = arith.subf %262, %261 : vector<32x1xf32>
    %264 = math.exp %263 : vector<32x1xf32>
    %cst_79 = arith.constant 1.000000e+00 : f32
    %265 = vector.broadcast %cst_79 : f32 to vector<32x1xf32>
    %266 = arith.addf %265, %264 : vector<32x1xf32>
    %267 = tpu.reciprocal %266 {approx = true} : vector<32x1xf32> -> vector<32x1xf32>
    %268 = vector.broadcast %267 : vector<32x1xf32> to vector<32x256xf32>
    %269 = arith.mulf %238, %268 : vector<32x256xf32>
    %270 = arith.addf %269, %144 : vector<32x256xf32>
    %cst_80 = arith.constant 0.000000e+00 : f32
    %271 = vector.broadcast %cst_80 : f32 to vector<32x256xf32>
    %272 = arith.cmpf oge, %270, %271 : vector<32x256xf32>
    %273 = vector.broadcast %0 : f32 to vector<32x256xf32>
    %274 = arith.mulf %273, %270 : vector<32x256xf32>
    %275 = arith.select %272, %270, %274 : vector<32x256xi1>, vector<32x256xf32>
    %c1_81 = arith.constant 1 : index
    %c0_82 = arith.constant 0 : index
    %c0_83 = arith.constant 0 : index
    %276 = vector.load %arg12[%c1_81, %c0_82, %c0_83] : memref<2x32x256xf32, #tpu.memory_space<vmem>>, vector<1x32x256xf32>
    %277 = vector.shape_cast %276 : vector<1x32x256xf32> to vector<32x256xf32>
    %278 = vector.shape_cast %275 : vector<32x256xf32> to vector<1x32x256xf32>
    tpu.vector_store %arg12[%c1_81, %c0_82, %c0_83], %278 {strides = array<i32>} : memref<2x32x256xf32, #tpu.memory_space<vmem>>, vector<1x32x256xf32>,
    return
  }
  func.func @transform_0(%arg0: i32) -> (i32, i32, i32) {
    %c0_i32 = arith.constant 0 : i32
    %c0_i32_0 = arith.constant 0 : i32
    %c0_i32_1 = arith.constant 0 : i32
    return %arg0, %c0_i32, %c0_i32_0 : i32, i32, i32
  }
  func.func @transform_1(%arg0: i32) -> (i32, i32, i32) {
    %c0_i32 = arith.constant 0 : i32
    %c0_i32_0 = arith.constant 0 : i32
    %c0_i32_1 = arith.constant 0 : i32
    %c0_i32_2 = arith.constant 0 : i32
    return %c0_i32, %c0_i32_0, %c0_i32_1 : i32, i32, i32
  }
  func.func @transform_2(%arg0: i32) -> (i32, i32) {
    %c0_i32 = arith.constant 0 : i32
    %c0_i32_0 = arith.constant 0 : i32
    %c0_i32_1 = arith.constant 0 : i32
    return %c0_i32, %c0_i32_0 : i32, i32
  }
  func.func @transform_3(%arg0: i32) -> (i32, i32) {
    %c0_i32 = arith.constant 0 : i32
    %c0_i32_0 = arith.constant 0 : i32
    %c0_i32_1 = arith.constant 0 : i32
    return %c0_i32, %c0_i32_0 : i32, i32
  }
  func.func @transform_4(%arg0: i32) -> (i32, i32) {
    %c0_i32 = arith.constant 0 : i32
    %c0_i32_0 = arith.constant 0 : i32
    %c0_i32_1 = arith.constant 0 : i32
    return %c0_i32, %c0_i32_0 : i32, i32
  }
  func.func @transform_5(%arg0: i32) -> (i32, i32) {
    %c0_i32 = arith.constant 0 : i32
    %c0_i32_0 = arith.constant 0 : i32
    %c0_i32_1 = arith.constant 0 : i32
    return %c0_i32, %c0_i32_0 : i32, i32
  }
  func.func @transform_6(%arg0: i32) -> (i32, i32) {
    %c0_i32 = arith.constant 0 : i32
    %c0_i32_0 = arith.constant 0 : i32
    %c0_i32_1 = arith.constant 0 : i32
    return %c0_i32, %c0_i32_0 : i32, i32
  }
  func.func @transform_7(%arg0: i32) -> (i32, i32) {
    %c0_i32 = arith.constant 0 : i32
    %c0_i32_0 = arith.constant 0 : i32
    %c0_i32_1 = arith.constant 0 : i32
    return %c0_i32, %c0_i32_0 : i32, i32
  }
  func.func @transform_8(%arg0: i32) -> (i32, i32) {
    %c0_i32 = arith.constant 0 : i32
    %c0_i32_0 = arith.constant 0 : i32
    %c0_i32_1 = arith.constant 0 : i32
    return %c0_i32, %c0_i32_0 : i32, i32
  }
  func.func @transform_9(%arg0: i32) -> (i32, i32) {
    %c0_i32 = arith.constant 0 : i32
    %c0_i32_0 = arith.constant 0 : i32
    %c0_i32_1 = arith.constant 0 : i32
    return %c0_i32, %c0_i32_0 : i32, i32
  }
  func.func @transform_10(%arg0: i32) -> i32 {
    %c0_i32 = arith.constant 0 : i32
    %c0_i32_0 = arith.constant 0 : i32
    return %c0_i32 : i32
  }
  func.func @transform_11(%arg0: i32) -> (i32, i32, i32) {
    %c0_i32 = arith.constant 0 : i32
    %c0_i32_0 = arith.constant 0 : i32
    %c0_i32_1 = arith.constant 0 : i32
    return %arg0, %c0_i32, %c0_i32_0 : i32, i32, i32
  }
}

</mosaic_0001>

<llo_original>
// kernel: irblock_forward.1
$region0: #{irblock_forward.1}
  #allocation0 [shape = 'u32[]', space=smem, size = 0x4, offset = 0x4, fixed_abs, tag = 'smem constant byte address 0x4 - core index']
  #allocation1 [shape = 'u32[72,128]{1,0:T(1,128)}', space=vmem, size = 0x9000, scoped, tag = 'internal scratch']
  %s0 = inlined_call_operand.vmem [shape: f32[2,32,256], index: 0, kind: input, shape index: {}]
  %s1 = inlined_call_operand.vmem [shape: f32[9,1,256], index: 1, kind: input, shape index: {}]
  %s2 = inlined_call_operand.vmem [shape: bf16[32,288], index: 2, kind: input, shape index: {}]
  %s3 = inlined_call_operand.vmem [shape: f32[32,256], index: 3, kind: input, shape index: {}]
  %s4 = inlined_call_operand.vmem [shape: bf16[32,288], index: 4, kind: input, shape index: {}]
  %s5 = inlined_call_operand.vmem [shape: f32[32,1], index: 5, kind: input, shape index: {}]
  %s6 = inlined_call_operand.vmem [shape: f32[32,2], index: 6, kind: input, shape index: {}]
  %s7 = inlined_call_operand.vmem [shape: f32[1,2], index: 7, kind: input, shape index: {}]
  %s8 = inlined_call_operand.vmem [shape: f32[32,2], index: 8, kind: input, shape index: {}]
  %s9 = inlined_call_operand.vmem [shape: f32[32,1], index: 9, kind: input, shape index: {}]
  %s10 = inlined_call_operand.vmem [shape: f32[2], index: 10, kind: input, shape index: {}]
  %s11 = inlined_call_operand.vmem [shape: f32[2,32,256], index: 11, kind: output, shape index: {}]
  %s12 = sld [smem:[#allocation0]]
  $region58: #{irblock_forward.1} parent=0
    _
  %s14 = ssub.s32 1, %s12
  %s15 = scalar_select 0, %s14, %s12
  $region1: #{irblock_forward.1} parent=0
    #allocation2 [shape = 'u8[512]{0}', space=smem, size = 0x200, scoped, tag = 'input window, operand 10, single buffered']
    #allocation3 [shape = 's32[1]{0}', space=sflag, size = 0x4, scoped, tag = 'scoped memory for irblock_forward.1']
    %16 = vsyncpa [#allocation3], 0
    // Predicated region
    $region2: #{irblock_forward.1} parent=1 // pred_check
      _
    $region3: #{irblock_forward.1} parent=1 // pred_check_branch
      %18 = sbr.rel (0) target = $region5
    $region4: #{irblock_forward.1} parent=1 // pred_region
      _
    $region5: #{irblock_forward.1} parent=1 // pred_fallthru
      _
    // Predicated region
    $region6: #{irblock_forward.1} parent=1 // pred_check
      _
    $region7: #{irblock_forward.1} parent=1 // pred_check_branch
      %20 = sbr.rel (0) target = $region9
    $region8: #{irblock_forward.1} parent=1 // pred_region
      _
    $region9: #{irblock_forward.1} parent=1 // pred_fallthru
      _
    // Predicated region
    $region10: #{irblock_forward.1} parent=1 // pred_check
      _
    $region11: #{irblock_forward.1} parent=1 // pred_check_branch
      %22 = sbr.rel (0) target = $region13
    $region12: #{irblock_forward.1} parent=1 // pred_region
      _
    $region13: #{irblock_forward.1} parent=1 // pred_fallthru
      _
    // Predicated region
    $region14: #{irblock_forward.1} parent=1 // pred_check
      _
    $region15: #{irblock_forward.1} parent=1 // pred_check_branch
      %24 = sbr.rel (0) target = $region17
    $region16: #{irblock_forward.1} parent=1 // pred_region
      _
    $region17: #{irblock_forward.1} parent=1 // pred_fallthru
      _
    // Predicated region
    $region18: #{irblock_forward.1} parent=1 // pred_check
      _
    $region19: #{irblock_forward.1} parent=1 // pred_check_branch
      %26 = sbr.rel (0) target = $region21
    $region20: #{irblock_forward.1} parent=1 // pred_region
      _
    $region21: #{irblock_forward.1} parent=1 // pred_fallthru
      _
    // Predicated region
    $region22: #{irblock_forward.1} parent=1 // pred_check
      _
    $region23: #{irblock_forward.1} parent=1 // pred_check_branch
      %28 = sbr.rel (0) target = $region25
    $region24: #{irblock_forward.1} parent=1 // pred_region
      _
    $region25: #{irblock_forward.1} parent=1 // pred_fallthru
      _
    // Predicated region
    $region26: #{irblock_forward.1} parent=1 // pred_check
      _
    $region27: #{irblock_forward.1} parent=1 // pred_check_branch
      %30 = sbr.rel (0) target = $region29
    $region28: #{irblock_forward.1} parent=1 // pred_region
      _
    $region29: #{irblock_forward.1} parent=1 // pred_fallthru
      _
    // Predicated region
    $region30: #{irblock_forward.1} parent=1 // pred_check
      _
    $region31: #{irblock_forward.1} parent=1 // pred_check_branch
      %32 = sbr.rel (0) target = $region33
    $region32: #{irblock_forward.1} parent=1 // pred_region
      _
    $region33: #{irblock_forward.1} parent=1 // pred_fallthru
      _
    // Predicated region
    $region34: #{irblock_forward.1} parent=1 // pred_check
      _
    $region35: #{irblock_forward.1} parent=1 // pred_check_branch
      %34 = sbr.rel (0) target = $region37
    $region36: #{irblock_forward.1} parent=1 // pred_region
      _
    $region37: #{irblock_forward.1} parent=1 // pred_fallthru
      _
    // Predicated region
    $region38: #{irblock_forward.1} parent=1 // pred_check
      _
    $region39: #{irblock_forward.1} parent=1 // pred_check_branch
      %36 = sbr.rel (0) target = $region41
    $region40: #{irblock_forward.1} parent=1 // pred_region
      _
    $region41: #{irblock_forward.1} parent=1 // pred_fallthru
      _
    // Predicated region
    $region42: #{irblock_forward.1} parent=1 // pred_check
      _
    $region43: #{irblock_forward.1} parent=1 // pred_check_branch
      %38 = sbr.rel (0) target = $region45
    $region44: #{irblock_forward.1} parent=1 // pred_region
      %40 = vsyncadd [#allocation3], 0
      %s42 = sshll.u32 %s10, 4
      %s43 = int_to_ptr.vmem [resolvable:$true] %s42
      %45 = dma.vmem_to_smem %s43, 16, [#allocation2], [#allocation3]
    $region45: #{irblock_forward.1} parent=1 // pred_fallthru
      _
    // Predicated region
    $region46: #{irblock_forward.1} parent=1 // pred_check
      _
    $region47: #{irblock_forward.1} parent=1 // pred_check_branch
      %47 = sbr.rel (0) target = $region49
    $region48: #{irblock_forward.1} parent=1 // pred_region
      %49 = dma.done [#allocation3], 16
    $region49: #{irblock_forward.1} parent=1 // pred_fallthru
      _
    %50 = sfence
    %s52 = sld [smem:[#allocation2]]
    %s53 = sld [smem:[#allocation2 + $0x1]]
    %v54 = vld [vmem:[%s1] sm:$0x3]
    %v55 = vld [vmem:[%s1 + $0x2] sm:$0x3]
    %v56 = vld [vmem:[%s1 + $0x4] sm:$0x3]
    %v57 = vld [vmem:[%s1 + $0x6] sm:$0x3]
    %v58 = vld [vmem:[%s1 + $0xa] sm:$0x3]
    %v59 = vld [vmem:[%s1 + $0xc] sm:$0x3]
    %v60 = vld [vmem:[%s1 + $0xe] sm:$0x3]
    %v61 = vld [vmem:[%s1 + $0x10] sm:$0x3]
    %v62 = vld [vmem:[%s2] sm:$0xff]
    %v63 = vld [vmem:[%s2 + $0x8] sm:$0xf]
    %v64 = vld [vmem:[%s2 + $0xc] sm:$0xff]
    %v65 = vld [vmem:[%s2 + $0x14] sm:$0xf]
    %v66 = vld [vmem:[%s2 + $0x18] sm:$0xff]
    %v67 = vld [vmem:[%s2 + $0x20] sm:$0xf]
    %v68 = vld [vmem:[%s2 + $0x24] sm:$0xff]
    %v69 = vld [vmem:[%s2 + $0x2c] sm:$0xf]
    %v70 = vld [vmem:[%s4] sm:$0xff]
    %v71 = vld [vmem:[%s4 + $0x8] sm:$0xf]
    %v72 = vld [vmem:[%s4 + $0xc] sm:$0xff]
    %v73 = vld [vmem:[%s4 + $0x14] sm:$0xf]
    %v74 = vld [vmem:[%s4 + $0x18] sm:$0xff]
    %v75 = vld [vmem:[%s4 + $0x20] sm:$0xf]
    %v76 = vld [vmem:[%s4 + $0x24] sm:$0xff]
    %v77 = vld [vmem:[%s4 + $0x2c] sm:$0xf]
    %v78 = vld [vmem:[%s3] sm:$0xff]
    %v79 = vld [vmem:[%s3 + $0x8] sm:$0xff]
    %v80 = vld [vmem:[%s3 + $0x10] sm:$0xff]
    %v81 = vld [vmem:[%s3 + $0x18] sm:$0xff]
    %v82 = vld [vmem:[%s3 + $0x20] sm:$0xff]
    %v83 = vld [vmem:[%s3 + $0x28] sm:$0xff]
    %v84 = vld [vmem:[%s3 + $0x30] sm:$0xff]
    %v85 = vld [vmem:[%s3 + $0x38] sm:$0xff]
    %v86 = vld [vmem:[%s5] sm:$0xff]
    %v87 = vld [vmem:[%s5 + $0x8] sm:$0xff]
    %v88 = vld [vmem:[%s5 + $0x10] sm:$0xff]
    %v89 = vld [vmem:[%s5 + $0x18] sm:$0xff]
    %v90 = vld [vmem:[%s0] sm:$0xff]
    %v91 = vld [vmem:[%s0 + $0x8] sm:$0xff]
    %v92 = vld [vmem:[%s0 + $0x10] sm:$0xff]
    %v93 = vld [vmem:[%s0 + $0x18] sm:$0xff]
    %v94 = vld [vmem:[%s0 + $0x20] sm:$0xff]
    %v95 = vld [vmem:[%s0 + $0x28] sm:$0xff]
    %v96 = vld [vmem:[%s0 + $0x30] sm:$0xff]
    %v97 = vld [vmem:[%s0 + $0x38] sm:$0xff]
    %98 = vrot.lane.b32.xlu0 %v90, 17
    %v99 = vpop.permute.xlu0 %98
    %100 = vrot.lane.b32.xlu0 %v92, 17
    %v101 = vpop.permute.xlu0 %100
    %102 = vrot.lane.b32.xlu0 %v94, 17
    %v103 = vpop.permute.xlu0 %102
    %104 = vrot.lane.b32.xlu0 %v96, 17
    %v105 = vpop.permute.xlu0 %104
    %106 = vrot.lane.b32.xlu0 %v91, 17
    %v107 = vpop.permute.xlu0 %106
    %108 = vrot.lane.b32.xlu0 %v93, 17
    %v109 = vpop.permute.xlu0 %108
    %110 = vrot.lane.b32.xlu0 %v95, 17
    %v111 = vpop.permute.xlu0 %110
    %112 = vrot.lane.b32.xlu0 %v97, 17
    %v113 = vpop.permute.xlu0 %112
    %v114 = vlaneseq
    %v115 = vand.u32 %v114, 127
    %vm116 = vcmp.lt.s32.totalorder %v115, 17
    %v117 = vsel %vm116, %v99, %v107
    %v118 = vsel %vm116, %v101, %v109
    %v119 = vsel %vm116, %v103, %v111
    %v120 = vsel %vm116, %v105, %v113
    %v121 = vsel %vm116, %v107, %v99
    %v122 = vsel %vm116, %v109, %v101
    %v123 = vsel %vm116, %v111, %v103
    %v124 = vsel %vm116, %v113, %v105
    %v126 = vperm.slane %v54, 0
    %v127 = vperm.slane %v54, 1
    %v130 = vmul.f32 %v121, %v126
    %v131 = vmul.f32 %v117, %v127
    %v132 = vmul.f32 %v122, %v126
    %v133 = vmul.f32 %v118, %v127
    %v134 = vmul.f32 %v123, %v126
    %v135 = vmul.f32 %v119, %v127
    %v136 = vmul.f32 %v124, %v126
    %v137 = vmul.f32 %v120, %v127
    %138 = vrot.lane.b32.xlu0 %v90, 16
    %v139 = vpop.permute.xlu0 %138
    %140 = vrot.lane.b32.xlu0 %v92, 16
    %v141 = vpop.permute.xlu0 %140
    %142 = vrot.lane.b32.xlu0 %v94, 16
    %v143 = vpop.permute.xlu0 %142
    %144 = vrot.lane.b32.xlu0 %v96, 16
    %v145 = vpop.permute.xlu0 %144
    %146 = vrot.lane.b32.xlu0 %v91, 16
    %v147 = vpop.permute.xlu0 %146
    %148 = vrot.lane.b32.xlu0 %v93, 16
    %v149 = vpop.permute.xlu0 %148
    %150 = vrot.lane.b32.xlu0 %v95, 16
    %v151 = vpop.permute.xlu0 %150
    %152 = vrot.lane.b32.xlu0 %v97, 16
    %v153 = vpop.permute.xlu0 %152
    %vm154 = vcmp.lt.s32.totalorder %v115, 16
    %v155 = vsel %vm154, %v139, %v147
    %v156 = vsel %vm154, %v141, %v149
    %v157 = vsel %vm154, %v143, %v151
    %v158 = vsel %vm154, %v145, %v153
    %v159 = vsel %vm154, %v147, %v139
    %v160 = vsel %vm154, %v149, %v141
    %v161 = vsel %vm154, %v151, %v143
    %v162 = vsel %vm154, %v153, %v145
    %v164 = vperm.slane %v55, 0
    %v165 = vperm.slane %v55, 1
    %v168 = vmul.f32 %v159, %v164
    %v169 = vmul.f32 %v155, %v165
    %v170 = vmul.f32 %v160, %v164
    %v171 = vmul.f32 %v156, %v165
    %v172 = vmul.f32 %v161, %v164
    %v173 = vmul.f32 %v157, %v165
    %v174 = vmul.f32 %v162, %v164
    %v175 = vmul.f32 %v158, %v165
    %176 = vrot.lane.b32.xlu0 %v90, 15
    %v177 = vpop.permute.xlu0 %176
    %178 = vrot.lane.b32.xlu0 %v92, 15
    %v179 = vpop.permute.xlu0 %178
    %180 = vrot.lane.b32.xlu0 %v94, 15
    %v181 = vpop.permute.xlu0 %180
    %182 = vrot.lane.b32.xlu0 %v96, 15
    %v183 = vpop.permute.xlu0 %182
    %184 = vrot.lane.b32.xlu0 %v91, 15
    %v185 = vpop.permute.xlu0 %184
    %186 = vrot.lane.b32.xlu0 %v93, 15
    %v187 = vpop.permute.xlu0 %186
    %188 = vrot.lane.b32.xlu0 %v95, 15
    %v189 = vpop.permute.xlu0 %188
    %190 = vrot.lane.b32.xlu0 %v97, 15
    %v191 = vpop.permute.xlu0 %190
    %vm192 = vcmp.lt.s32.totalorder %v115, 15
    %v193 = vsel %vm192, %v177, %v185
    %v194 = vsel %vm192, %v179, %v187
    %v195 = vsel %vm192, %v181, %v189
    %v196 = vsel %vm192, %v183, %v191
    %v197 = vsel %vm192, %v185, %v177
    %v198 = vsel %vm192, %v187, %v179
    %v199 = vsel %vm192, %v189, %v181
    %v200 = vsel %vm192, %v191, %v183
    %v202 = vperm.slane %v56, 0
    %v203 = vperm.slane %v56, 1
    %v206 = vmul.f32 %v197, %v202
    %v207 = vmul.f32 %v193, %v203
    %v208 = vmul.f32 %v198, %v202
    %v209 = vmul.f32 %v194, %v203
    %v210 = vmul.f32 %v199, %v202
    %v211 = vmul.f32 %v195, %v203
    %v212 = vmul.f32 %v200, %v202
    %v213 = vmul.f32 %v196, %v203
    %214 = vrot.lane.b32.xlu0 %v90, 1
    %v215 = vpop.permute.xlu0 %214
    %216 = vrot.lane.b32.xlu0 %v92, 1
    %v217 = vpop.permute.xlu0 %216
    %218 = vrot.lane.b32.xlu0 %v94, 1
    %v219 = vpop.permute.xlu0 %218
    %220 = vrot.lane.b32.xlu0 %v96, 1
    %v221 = vpop.permute.xlu0 %220
    %222 = vrot.lane.b32.xlu0 %v91, 1
    %v223 = vpop.permute.xlu0 %222
    %224 = vrot.lane.b32.xlu0 %v93, 1
    %v225 = vpop.permute.xlu0 %224
    %226 = vrot.lane.b32.xlu0 %v95, 1
    %v227 = vpop.permute.xlu0 %226
    %228 = vrot.lane.b32.xlu0 %v97, 1
    %v229 = vpop.permute.xlu0 %228
    %vm230 = vcmp.lt.s32.totalorder %v115, 1
    %v231 = vsel %vm230, %v215, %v223
    %v232 = vsel %vm230, %v217, %v225
    %v233 = vsel %vm230, %v219, %v227
    %v234 = vsel %vm230, %v221, %v229
    %v235 = vsel %vm230, %v223, %v215
    %v236 = vsel %vm230, %v225, %v217
    %v237 = vsel %vm230, %v227, %v219
    %v238 = vsel %vm230, %v229, %v221
    %v240 = vperm.slane %v57, 0
    %v241 = vperm.slane %v57, 1
    %v244 = vmul.f32 %v235, %v240
    %v245 = vmul.f32 %v231, %v241
    %v246 = vmul.f32 %v236, %v240
    %v247 = vmul.f32 %v232, %v241
    %v248 = vmul.f32 %v237, %v240
    %v249 = vmul.f32 %v233, %v241
    %v250 = vmul.f32 %v238, %v240
    %v251 = vmul.f32 %v234, %v241
    %252 = vrot.lane.b32.xlu0 %v90, 127
    %v253 = vpop.permute.xlu0 %252
    %254 = vrot.lane.b32.xlu0 %v92, 127
    %v255 = vpop.permute.xlu0 %254
    %256 = vrot.lane.b32.xlu0 %v94, 127
    %v257 = vpop.permute.xlu0 %256
    %258 = vrot.lane.b32.xlu0 %v96, 127
    %v259 = vpop.permute.xlu0 %258
    %260 = vrot.lane.b32.xlu0 %v91, 127
    %v261 = vpop.permute.xlu0 %260
    %262 = vrot.lane.b32.xlu0 %v93, 127
    %v263 = vpop.permute.xlu0 %262
    %264 = vrot.lane.b32.xlu0 %v95, 127
    %v265 = vpop.permute.xlu0 %264
    %266 = vrot.lane.b32.xlu0 %v97, 127
    %v267 = vpop.permute.xlu0 %266
    %vm268 = vcmp.lt.s32.totalorder %v115, 127
    %v269 = vsel %vm268, %v253, %v261
    %v270 = vsel %vm268, %v255, %v263
    %v271 = vsel %vm268, %v257, %v265
    %v272 = vsel %vm268, %v259, %v267
    %v273 = vsel %vm268, %v261, %v253
    %v274 = vsel %vm268, %v263, %v255
    %v275 = vsel %vm268, %v265, %v257
    %v276 = vsel %vm268, %v267, %v259
    %v278 = vperm.slane %v58, 0
    %v279 = vperm.slane %v58, 1
    %v282 = vmul.f32 %v269, %v278
    %v283 = vmul.f32 %v273, %v279
    %v284 = vmul.f32 %v270, %v278
    %v285 = vmul.f32 %v274, %v279
    %v286 = vmul.f32 %v271, %v278
    %v287 = vmul.f32 %v275, %v279
    %v288 = vmul.f32 %v272, %v278
    %v289 = vmul.f32 %v276, %v279
    %290 = vrot.lane.b32.xlu0 %v90, 113
    %v291 = vpop.permute.xlu0 %290
    %292 = vrot.lane.b32.xlu0 %v92, 113
    %v293 = vpop.permute.xlu0 %292
    %294 = vrot.lane.b32.xlu0 %v94, 113
    %v295 = vpop.permute.xlu0 %294
    %296 = vrot.lane.b32.xlu0 %v96, 113
    %v297 = vpop.permute.xlu0 %296
    %298 = vrot.lane.b32.xlu0 %v91, 113
    %v299 = vpop.permute.xlu0 %298
    %300 = vrot.lane.b32.xlu0 %v93, 113
    %v301 = vpop.permute.xlu0 %300
    %302 = vrot.lane.b32.xlu0 %v95, 113
    %v303 = vpop.permute.xlu0 %302
    %304 = vrot.lane.b32.xlu0 %v97, 113
    %v305 = vpop.permute.xlu0 %304
    %vm306 = vcmp.lt.s32.totalorder %v115, 113
    %v307 = vsel %vm306, %v291, %v299
    %v308 = vsel %vm306, %v293, %v301
    %v309 = vsel %vm306, %v295, %v303
    %v310 = vsel %vm306, %v297, %v305
    %v311 = vsel %vm306, %v299, %v291
    %v312 = vsel %vm306, %v301, %v293
    %v313 = vsel %vm306, %v303, %v295
    %v314 = vsel %vm306, %v305, %v297
    %v316 = vperm.slane %v59, 0
    %v317 = vperm.slane %v59, 1
    %v320 = vmul.f32 %v307, %v316
    %v321 = vmul.f32 %v311, %v317
    %v322 = vmul.f32 %v308, %v316
    %v323 = vmul.f32 %v312, %v317
    %v324 = vmul.f32 %v309, %v316
    %v325 = vmul.f32 %v313, %v317
    %v326 = vmul.f32 %v310, %v316
    %v327 = vmul.f32 %v314, %v317
    %328 = vrot.lane.b32.xlu0 %v90, 112
    %v329 = vpop.permute.xlu0 %328
    %330 = vrot.lane.b32.xlu0 %v92, 112
    %v331 = vpop.permute.xlu0 %330
    %332 = vrot.lane.b32.xlu0 %v94, 112
    %v333 = vpop.permute.xlu0 %332
    %334 = vrot.lane.b32.xlu0 %v96, 112
    %v335 = vpop.permute.xlu0 %334
    %336 = vrot.lane.b32.xlu0 %v91, 112
    %v337 = vpop.permute.xlu0 %336
    %338 = vrot.lane.b32.xlu0 %v93, 112
    %v339 = vpop.permute.xlu0 %338
    %340 = vrot.lane.b32.xlu0 %v95, 112
    %v341 = vpop.permute.xlu0 %340
    %342 = vrot.lane.b32.xlu0 %v97, 112
    %v343 = vpop.permute.xlu0 %342
    %vm344 = vcmp.lt.s32.totalorder %v115, 112
    %v345 = vsel %vm344, %v329, %v337
    %v346 = vsel %vm344, %v331, %v339
    %v347 = vsel %vm344, %v333, %v341
    %v348 = vsel %vm344, %v335, %v343
    %v349 = vsel %vm344, %v337, %v329
    %v350 = vsel %vm344, %v339, %v331
    %v351 = vsel %vm344, %v341, %v333
    %v352 = vsel %vm344, %v343, %v335
    %v354 = vperm.slane %v60, 0
    %v355 = vperm.slane %v60, 1
    %v358 = vmul.f32 %v345, %v354
    %v359 = vmul.f32 %v349, %v355
    %v360 = vmul.f32 %v346, %v354
    %v361 = vmul.f32 %v350, %v355
    %v362 = vmul.f32 %v347, %v354
    %v363 = vmul.f32 %v351, %v355
    %v364 = vmul.f32 %v348, %v354
    %v365 = vmul.f32 %v352, %v355
    %366 = vrot.lane.b32.xlu0 %v90, 111
    %v367 = vpop.permute.xlu0 %366
    %368 = vrot.lane.b32.xlu0 %v92, 111
    %v369 = vpop.permute.xlu0 %368
    %370 = vrot.lane.b32.xlu0 %v94, 111
    %v371 = vpop.permute.xlu0 %370
    %372 = vrot.lane.b32.xlu0 %v96, 111
    %v373 = vpop.permute.xlu0 %372
    %374 = vrot.lane.b32.xlu0 %v91, 111
    %v375 = vpop.permute.xlu0 %374
    %376 = vrot.lane.b32.xlu0 %v93, 111
    %v377 = vpop.permute.xlu0 %376
    %378 = vrot.lane.b32.xlu0 %v95, 111
    %v379 = vpop.permute.xlu0 %378
    %380 = vrot.lane.b32.xlu0 %v97, 111
    %v381 = vpop.permute.xlu0 %380
    %vm382 = vcmp.lt.s32.totalorder %v115, 111
    %v383 = vsel %vm382, %v367, %v375
    %v384 = vsel %vm382, %v369, %v377
    %v385 = vsel %vm382, %v371, %v379
    %v386 = vsel %vm382, %v373, %v381
    %v387 = vsel %vm382, %v375, %v367
    %v388 = vsel %vm382, %v377, %v369
    %v389 = vsel %vm382, %v379, %v371
    %v390 = vsel %vm382, %v381, %v373
    %v392 = vperm.slane %v61, 0
    %v393 = vperm.slane %v61, 1
    %v396 = vmul.f32 %v383, %v392
    %v397 = vmul.f32 %v387, %v393
    %v398 = vmul.f32 %v384, %v392
    %v399 = vmul.f32 %v388, %v393
    %v400 = vmul.f32 %v385, %v392
    %v401 = vmul.f32 %v389, %v393
    %v402 = vmul.f32 %v386, %v392
    %v403 = vmul.f32 %v390, %v393
    %v404 = vpack.c.bf16 %v132, %v130
    %v405 = vpack.c.bf16 %v133, %v131
    %v406 = vpack.c.bf16 %v136, %v134
    %v407 = vpack.c.bf16 %v137, %v135
    %v408 = vpack.c.bf16 %v170, %v168
    %v409 = vpack.c.bf16 %v171, %v169
    %v410 = vpack.c.bf16 %v174, %v172
    %v411 = vpack.c.bf16 %v175, %v173
    %v412 = vpack.c.bf16 %v208, %v206
    %v413 = vpack.c.bf16 %v209, %v207
    %v414 = vpack.c.bf16 %v212, %v210
    %v415 = vpack.c.bf16 %v213, %v211
    %v416 = vpack.c.bf16 %v246, %v244
    %v417 = vpack.c.bf16 %v247, %v245
    %v418 = vpack.c.bf16 %v250, %v248
    %v419 = vpack.c.bf16 %v251, %v249
    %v420 = vpack.c.bf16 %v92, %v90
    %v421 = vpack.c.bf16 %v93, %v91
    %v422 = vpack.c.bf16 %v96, %v94
    %v423 = vpack.c.bf16 %v97, %v95
    %v424 = vpack.c.bf16 %v284, %v282
    %v425 = vpack.c.bf16 %v285, %v283
    %v426 = vpack.c.bf16 %v288, %v286
    %v427 = vpack.c.bf16 %v289, %v287
    %v428 = vpack.c.bf16 %v322, %v320
    %v429 = vpack.c.bf16 %v323, %v321
    %v430 = vpack.c.bf16 %v326, %v324
    %v431 = vpack.c.bf16 %v327, %v325
    %v432 = vpack.c.bf16 %v360, %v358
    %v433 = vpack.c.bf16 %v361, %v359
    %v434 = vpack.c.bf16 %v364, %v362
    %v435 = vpack.c.bf16 %v365, %v363
    %v436 = vpack.c.bf16 %v398, %v396
    %v437 = vpack.c.bf16 %v399, %v397
    %v438 = vpack.c.bf16 %v402, %v400
    %v439 = vpack.c.bf16 %v403, %v401
    %v448 = vunpack.c.l.b16 %v62
    %v449 = vunpack.c.h.b16 %v62
    %v450 = vunpack.c.l.b16 %v63
    %v451 = vunpack.c.l.b16 %v64
    %v452 = vunpack.c.h.b16 %v64
    %v453 = vunpack.c.l.b16 %v65
    %v454 = vunpack.c.l.b16 %v66
    %v455 = vunpack.c.h.b16 %v66
    %v456 = vunpack.c.l.b16 %v67
    %v457 = vunpack.c.l.b16 %v68
    %v458 = vunpack.c.h.b16 %v68
    %v459 = vunpack.c.l.b16 %v69
    %v460 = vpack.c.b16 %v451, %v448
    %v461 = vpack.c.b16 %v452, %v449
    %v462 = vpack.c.b16 %v453, %v450
    %v463 = vpack.c.b16 %v457, %v454
    %v464 = vpack.c.b16 %v458, %v455
    %v465 = vpack.c.b16 %v459, %v456
    %vm470 = vcmask 261120
    %v472 = vsel %vm470, %v462, 0
    %v475 = vsel %vm470, %v465, 0
    %477 = vmatpush.bf16.msra.mxu0 %v418
    %478 = vmatpush.bf16.msra.mxu0 %v416
    %479 = vmatpush.bf16.msra.mxu0 %v414
    %480 = vmatpush.bf16.msra.mxu0 %v412
    %481 = vmatpush.bf16.msra.mxu0 %v410
    %482 = vmatpush.bf16.msra.mxu0 %v408
    %483 = vmatpush.bf16.msra.mxu0 %v406
    %484 = vmatpush.bf16.msra.mxu0 %v404
    %485 = vmatmul.bf16.gmra.mxu0 %v460
    %v486 = vpop.f32.mrf.mxu0
    %v487 = vadd.f32 %v78, %v486
    %v488 = vpop.f32.mrf.mxu0
    %v489 = vadd.f32 %v80, %v488
    %490 = vmatmul.bf16.gmra.mxu0 %v463
    %v491 = vpop.f32.mrf.mxu0
    %v492 = vadd.f32 %v82, %v491
    %v493 = vpop.f32.mrf.mxu0
    %v494 = vadd.f32 %v84, %v493
    %495 = vdwg.mxu0
    %496 = vmatpush.bf16.msra.mxu0 %v434
    %497 = vmatpush.bf16.msra.mxu0 %v432
    %498 = vmatpush.bf16.msra.mxu0 %v430
    %499 = vmatpush.bf16.msra.mxu0 %v428
    %500 = vmatpush.bf16.msra.mxu0 %v426
    %501 = vmatpush.bf16.msra.mxu0 %v424
    %502 = vmatpush.bf16.msra.mxu0 %v422
    %503 = vmatpush.bf16.msra.mxu0 %v420
    %504 = vmatmul.bf16.gmra.mxu0 %v461
    %v505 = vpop.f32.mrf.mxu0
    %v506 = vadd.f32 %v487, %v505
    %v507 = vpop.f32.mrf.mxu0
    %v508 = vadd.f32 %v489, %v507
    %509 = vmatmul.bf16.gmra.mxu0 %v464
    %v510 = vpop.f32.mrf.mxu0
    %v511 = vadd.f32 %v492, %v510
    %v512 = vpop.f32.mrf.mxu0
    %v513 = vadd.f32 %v494, %v512
    %514 = vdwg.mxu0
    %515 = vmatpush.bf16.msra.mxu0 0
    %516 = vmatpush.bf16.msra.mxu0 0
    %517 = vmatpush.bf16.msra.mxu0 0
    %518 = vmatpush.bf16.msra.mxu0 0
    %519 = vmatpush.bf16.msra.mxu0 0
    %520 = vmatpush.bf16.msra.mxu0 0
    %521 = vmatpush.bf16.msra.mxu0 %v438
    %522 = vmatpush.bf16.msra.mxu0 %v436
    %523 = vmatmul.bf16.gmra.mxu0 %v472
    %v524 = vpop.f32.mrf.mxu0
    %v525 = vadd.f32 %v506, %v524
    %v526 = vpop.f32.mrf.mxu0
    %v527 = vadd.f32 %v508, %v526
    %528 = vmatmul.bf16.gmra.mxu0 %v475
    %v529 = vpop.f32.mrf.mxu0
    %v530 = vadd.f32 %v511, %v529
    %v531 = vpop.f32.mrf.mxu0
    %v532 = vadd.f32 %v513, %v531
    %533 = vdwg.mxu0
    %534 = vmatpush.bf16.msra.mxu0 %v419
    %535 = vmatpush.bf16.msra.mxu0 %v417
    %536 = vmatpush.bf16.msra.mxu0 %v415
    %537 = vmatpush.bf16.msra.mxu0 %v413
    %538 = vmatpush.bf16.msra.mxu0 %v411
    %539 = vmatpush.bf16.msra.mxu0 %v409
    %540 = vmatpush.bf16.msra.mxu0 %v407
    %541 = vmatpush.bf16.msra.mxu0 %v405
    %542 = vmatmul.bf16.gmra.mxu0 %v460
    %v543 = vpop.f32.mrf.mxu0
    %v544 = vadd.f32 %v79, %v543
    %v545 = vpop.f32.mrf.mxu0
    %v546 = vadd.f32 %v81, %v545
    %547 = vmatmul.bf16.gmra.mxu0 %v463
    %v548 = vpop.f32.mrf.mxu0
    %v549 = vadd.f32 %v83, %v548
    %v550 = vpop.f32.mrf.mxu0
    %v551 = vadd.f32 %v85, %v550
    %552 = vdwg.mxu0
    %553 = vmatpush.bf16.msra.mxu0 %v435
    %554 = vmatpush.bf16.msra.mxu0 %v433
    %555 = vmatpush.bf16.msra.mxu0 %v431
    %556 = vmatpush.bf16.msra.mxu0 %v429
    %557 = vmatpush.bf16.msra.mxu0 %v427
    %558 = vmatpush.bf16.msra.mxu0 %v425
    %559 = vmatpush.bf16.msra.mxu0 %v423
    %560 = vmatpush.bf16.msra.mxu0 %v421
    %561 = vmatmul.bf16.gmra.mxu0 %v461
    %v562 = vpop.f32.mrf.mxu0
    %v563 = vadd.f32 %v544, %v562
    %v564 = vpop.f32.mrf.mxu0
    %v565 = vadd.f32 %v546, %v564
    %566 = vmatmul.bf16.gmra.mxu0 %v464
    %v567 = vpop.f32.mrf.mxu0
    %v568 = vadd.f32 %v549, %v567
    %v569 = vpop.f32.mrf.mxu0
    %v570 = vadd.f32 %v551, %v569
    %571 = vdwg.mxu0
    %572 = vmatpush.bf16.msra.mxu0 0
    %573 = vmatpush.bf16.msra.mxu0 0
    %574 = vmatpush.bf16.msra.mxu0 0
    %575 = vmatpush.bf16.msra.mxu0 0
    %576 = vmatpush.bf16.msra.mxu0 0
    %577 = vmatpush.bf16.msra.mxu0 0
    %578 = vmatpush.bf16.msra.mxu0 %v439
    %579 = vmatpush.bf16.msra.mxu0 %v437
    %580 = vmatmul.bf16.gmra.mxu0 %v472
    %v581 = vpop.f32.mrf.mxu0
    %v582 = vadd.f32 %v563, %v581
    %v583 = vpop.f32.mrf.mxu0
    %v584 = vadd.f32 %v565, %v583
    %585 = vmatmul.bf16.gmra.mxu0 %v475
    %v586 = vpop.f32.mrf.mxu0
    %v587 = vadd.f32 %v568, %v586
    %v588 = vpop.f32.mrf.mxu0
    %v589 = vadd.f32 %v570, %v588
    %590 = vdwg.mxu0
    %vm591 = vcmp.ge.f32.partialorder %v525, 0.0
    %vm592 = vcmp.ge.f32.partialorder %v582, 0.0
    %vm593 = vcmp.ge.f32.partialorder %v527, 0.0
    %vm594 = vcmp.ge.f32.partialorder %v584, 0.0
    %vm595 = vcmp.ge.f32.partialorder %v530, 0.0
    %vm596 = vcmp.ge.f32.partialorder %v587, 0.0
    %vm597 = vcmp.ge.f32.partialorder %v532, 0.0
    %vm598 = vcmp.ge.f32.partialorder %v589, 0.0
    %v599 = vstv %s52
    %v600 = vmul.f32 %v599, %v525
    %v601 = vmul.f32 %v599, %v582
    %v602 = vmul.f32 %v599, %v527
    %v603 = vmul.f32 %v599, %v584
    %v604 = vmul.f32 %v599, %v530
    %v605 = vmul.f32 %v599, %v587
    %v606 = vmul.f32 %v599, %v532
    %v607 = vmul.f32 %v599, %v589
    %v608 = vsel %vm591, %v525, %v600
    %v609 = vsel %vm592, %v582, %v601
    %v610 = vsel %vm593, %v527, %v602
    %v611 = vsel %vm594, %v584, %v603
    %v612 = vsel %vm595, %v530, %v604
    %v613 = vsel %vm596, %v587, %v605
    %v614 = vsel %vm597, %v532, %v606
    %v615 = vsel %vm598, %v589, %v607
    %616 = vrot.lane.b32.xlu0 %v608, 17
    %v617 = vpop.permute.xlu0 %616
    %618 = vrot.lane.b32.xlu0 %v610, 17
    %v619 = vpop.permute.xlu0 %618
    %620 = vrot.lane.b32.xlu0 %v612, 17
    %v621 = vpop.permute.xlu0 %620
    %622 = vrot.lane.b32.xlu0 %v614, 17
    %v623 = vpop.permute.xlu0 %622
    %624 = vrot.lane.b32.xlu0 %v609, 17
    %v625 = vpop.permute.xlu0 %624
    %626 = vrot.lane.b32.xlu0 %v611, 17
    %v627 = vpop.permute.xlu0 %626
    %628 = vrot.lane.b32.xlu0 %v613, 17
    %v629 = vpop.permute.xlu0 %628
    %630 = vrot.lane.b32.xlu0 %v615, 17
    %v631 = vpop.permute.xlu0 %630
    %v632 = vsel %vm116, %v617, %v625
    %v633 = vsel %vm116, %v619, %v627
    %v634 = vsel %vm116, %v621, %v629
    %v635 = vsel %vm116, %v623, %v631
    %v636 = vsel %vm116, %v625, %v617
    %v637 = vsel %vm116, %v627, %v619
    %v638 = vsel %vm116, %v629, %v621
    %v639 = vsel %vm116, %v631, %v623
    %v640 = vmul.f32 %v636, %v126
    %v641 = vmul.f32 %v632, %v127
    %v642 = vmul.f32 %v637, %v126
    %v643 = vmul.f32 %v633, %v127
    %v644 = vmul.f32 %v638, %v126
    %v645 = vmul.f32 %v634, %v127
    %v646 = vmul.f32 %v639, %v126
    %v647 = vmul.f32 %v635, %v127
    %648 = vrot.lane.b32.xlu0 %v608, 16
    %v649 = vpop.permute.xlu0 %648
    %650 = vrot.lane.b32.xlu0 %v610, 16
    %v651 = vpop.permute.xlu0 %650
    %652 = vrot.lane.b32.xlu0 %v612, 16
    %v653 = vpop.permute.xlu0 %652
    %654 = vrot.lane.b32.xlu0 %v614, 16
    %v655 = vpop.permute.xlu0 %654
    %656 = vrot.lane.b32.xlu0 %v609, 16
    %v657 = vpop.permute.xlu0 %656
    %658 = vrot.lane.b32.xlu0 %v611, 16
    %v659 = vpop.permute.xlu0 %658
    %660 = vrot.lane.b32.xlu0 %v613, 16
    %v661 = vpop.permute.xlu0 %660
    %662 = vrot.lane.b32.xlu0 %v615, 16
    %v663 = vpop.permute.xlu0 %662
    %v664 = vsel %vm154, %v649, %v657
    %v665 = vsel %vm154, %v651, %v659
    %v666 = vsel %vm154, %v653, %v661
    %v667 = vsel %vm154, %v655, %v663
    %v668 = vsel %vm154, %v657, %v649
    %v669 = vsel %vm154, %v659, %v651
    %v670 = vsel %vm154, %v661, %v653
    %v671 = vsel %vm154, %v663, %v655
    %v672 = vmul.f32 %v668, %v164
    %v673 = vmul.f32 %v664, %v165
    %v674 = vmul.f32 %v669, %v164
    %v675 = vmul.f32 %v665, %v165
    %v676 = vmul.f32 %v670, %v164
    %v677 = vmul.f32 %v666, %v165
    %v678 = vmul.f32 %v671, %v164
    %v679 = vmul.f32 %v667, %v165
    %680 = vrot.lane.b32.xlu0 %v608, 15
    %v681 = vpop.permute.xlu0 %680
    %682 = vrot.lane.b32.xlu0 %v610, 15
    %v683 = vpop.permute.xlu0 %682
    %684 = vrot.lane.b32.xlu0 %v612, 15
    %v685 = vpop.permute.xlu0 %684
    %686 = vrot.lane.b32.xlu0 %v614, 15
    %v687 = vpop.permute.xlu0 %686
    %688 = vrot.lane.b32.xlu0 %v609, 15
    %v689 = vpop.permute.xlu0 %688
    %690 = vrot.lane.b32.xlu0 %v611, 15
    %v691 = vpop.permute.xlu0 %690
    %692 = vrot.lane.b32.xlu0 %v613, 15
    %v693 = vpop.permute.xlu0 %692
    %694 = vrot.lane.b32.xlu0 %v615, 15
    %v695 = vpop.permute.xlu0 %694
    %v696 = vsel %vm192, %v681, %v689
    %v697 = vsel %vm192, %v683, %v691
    %v698 = vsel %vm192, %v685, %v693
    %v699 = vsel %vm192, %v687, %v695
    %v700 = vsel %vm192, %v689, %v681
    %v701 = vsel %vm192, %v691, %v683
    %v702 = vsel %vm192, %v693, %v685
    %v703 = vsel %vm192, %v695, %v687
    %v704 = vmul.f32 %v700, %v202
    %v705 = vmul.f32 %v696, %v203
    %v706 = vmul.f32 %v701, %v202
    %v707 = vmul.f32 %v697, %v203
    %v708 = vmul.f32 %v702, %v202
    %v709 = vmul.f32 %v698, %v203
    %v710 = vmul.f32 %v703, %v202
    %v711 = vmul.f32 %v699, %v203
    %712 = vrot.lane.b32.xlu0 %v608, 1
    %v713 = vpop.permute.xlu0 %712
    %714 = vrot.lane.b32.xlu0 %v610, 1
    %v715 = vpop.permute.xlu0 %714
    %716 = vrot.lane.b32.xlu0 %v612, 1
    %v717 = vpop.permute.xlu0 %716
    %718 = vrot.lane.b32.xlu0 %v614, 1
    %v719 = vpop.permute.xlu0 %718
    %720 = vrot.lane.b32.xlu0 %v609, 1
    %v721 = vpop.permute.xlu0 %720
    %722 = vrot.lane.b32.xlu0 %v611, 1
    %v723 = vpop.permute.xlu0 %722
    %724 = vrot.lane.b32.xlu0 %v613, 1
    %v725 = vpop.permute.xlu0 %724
    %726 = vrot.lane.b32.xlu0 %v615, 1
    %v727 = vpop.permute.xlu0 %726
    %v728 = vsel %vm230, %v713, %v721
    %v729 = vsel %vm230, %v715, %v723
    %v730 = vsel %vm230, %v717, %v725
    %v731 = vsel %vm230, %v719, %v727
    %v732 = vsel %vm230, %v721, %v713
    %v733 = vsel %vm230, %v723, %v715
    %v734 = vsel %vm230, %v725, %v717
    %v735 = vsel %vm230, %v727, %v719
    %v736 = vmul.f32 %v732, %v240
    %v737 = vmul.f32 %v728, %v241
    %v738 = vmul.f32 %v733, %v240
    %v739 = vmul.f32 %v729, %v241
    %v740 = vmul.f32 %v734, %v240
    %v741 = vmul.f32 %v730, %v241
    %v742 = vmul.f32 %v735, %v240
    %v743 = vmul.f32 %v731, %v241
    %744 = vrot.lane.b32.xlu0 %v608, 127
    %v745 = vpop.permute.xlu0 %744
    %746 = vrot.lane.b32.xlu0 %v610, 127
    %v747 = vpop.permute.xlu0 %746
    %748 = vrot.lane.b32.xlu0 %v612, 127
    %v749 = vpop.permute.xlu0 %748
    %750 = vrot.lane.b32.xlu0 %v614, 127
    %v751 = vpop.permute.xlu0 %750
    %752 = vrot.lane.b32.xlu0 %v609, 127
    %v753 = vpop.permute.xlu0 %752
    %754 = vrot.lane.b32.xlu0 %v611, 127
    %v755 = vpop.permute.xlu0 %754
    %756 = vrot.lane.b32.xlu0 %v613, 127
    %v757 = vpop.permute.xlu0 %756
    %758 = vrot.lane.b32.xlu0 %v615, 127
    %v759 = vpop.permute.xlu0 %758
    %v760 = vsel %vm268, %v745, %v753
    %v761 = vsel %vm268, %v747, %v755
    %v762 = vsel %vm268, %v749, %v757
    %v763 = vsel %vm268, %v751, %v759
    %v764 = vsel %vm268, %v753, %v745
    %v765 = vsel %vm268, %v755, %v747
    %v766 = vsel %vm268, %v757, %v749
    %v767 = vsel %vm268, %v759, %v751
    %v768 = vmul.f32 %v760, %v278
    %v769 = vmul.f32 %v764, %v279
    %v770 = vmul.f32 %v761, %v278
    %v771 = vmul.f32 %v765, %v279
    %v772 = vmul.f32 %v762, %v278
    %v773 = vmul.f32 %v766, %v279
    %v774 = vmul.f32 %v763, %v278
    %v775 = vmul.f32 %v767, %v279
    %776 = vrot.lane.b32.xlu0 %v608, 113
    %v777 = vpop.permute.xlu0 %776
    %778 = vrot.lane.b32.xlu0 %v610, 113
    %v779 = vpop.permute.xlu0 %778
    %780 = vrot.lane.b32.xlu0 %v612, 113
    %v781 = vpop.permute.xlu0 %780
    %782 = vrot.lane.b32.xlu0 %v614, 113
    %v783 = vpop.permute.xlu0 %782
    %784 = vrot.lane.b32.xlu0 %v609, 113
    %v785 = vpop.permute.xlu0 %784
    %786 = vrot.lane.b32.xlu0 %v611, 113
    %v787 = vpop.permute.xlu0 %786
    %788 = vrot.lane.b32.xlu0 %v613, 113
    %v789 = vpop.permute.xlu0 %788
    %790 = vrot.lane.b32.xlu0 %v615, 113
    %v791 = vpop.permute.xlu0 %790
    %v792 = vsel %vm306, %v777, %v785
    %v793 = vsel %vm306, %v779, %v787
    %v794 = vsel %vm306, %v781, %v789
    %v795 = vsel %vm306, %v783, %v791
    %v796 = vsel %vm306, %v785, %v777
    %v797 = vsel %vm306, %v787, %v779
    %v798 = vsel %vm306, %v789, %v781
    %v799 = vsel %vm306, %v791, %v783
    %v800 = vmul.f32 %v792, %v316
    %v801 = vmul.f32 %v796, %v317
    %v802 = vmul.f32 %v793, %v316
    %v803 = vmul.f32 %v797, %v317
    %v804 = vmul.f32 %v794, %v316
    %v805 = vmul.f32 %v798, %v317
    %v806 = vmul.f32 %v795, %v316
    %v807 = vmul.f32 %v799, %v317
    %808 = vrot.lane.b32.xlu0 %v608, 112
    %v809 = vpop.permute.xlu0 %808
    %810 = vrot.lane.b32.xlu0 %v610, 112
    %v811 = vpop.permute.xlu0 %810
    %812 = vrot.lane.b32.xlu0 %v612, 112
    %v813 = vpop.permute.xlu0 %812
    %814 = vrot.lane.b32.xlu0 %v614, 112
    %v815 = vpop.permute.xlu0 %814
    %816 = vrot.lane.b32.xlu0 %v609, 112
    %v817 = vpop.permute.xlu0 %816
    %818 = vrot.lane.b32.xlu0 %v611, 112
    %v819 = vpop.permute.xlu0 %818
    %820 = vrot.lane.b32.xlu0 %v613, 112
    %v821 = vpop.permute.xlu0 %820
    %822 = vrot.lane.b32.xlu0 %v615, 112
    %v823 = vpop.permute.xlu0 %822
    %v824 = vsel %vm344, %v809, %v817
    %v825 = vsel %vm344, %v811, %v819
    %v826 = vsel %vm344, %v813, %v821
    %v827 = vsel %vm344, %v815, %v823
    %v828 = vsel %vm344, %v817, %v809
    %v829 = vsel %vm344, %v819, %v811
    %v830 = vsel %vm344, %v821, %v813
    %v831 = vsel %vm344, %v823, %v815
    %v832 = vmul.f32 %v824, %v354
    %v833 = vmul.f32 %v828, %v355
    %v834 = vmul.f32 %v825, %v354
    %v835 = vmul.f32 %v829, %v355
    %v836 = vmul.f32 %v826, %v354
    %v837 = vmul.f32 %v830, %v355
    %v838 = vmul.f32 %v827, %v354
    %v839 = vmul.f32 %v831, %v355
    %840 = vrot.lane.b32.xlu0 %v608, 111
    %v841 = vpop.permute.xlu0 %840
    %842 = vrot.lane.b32.xlu0 %v610, 111
    %v843 = vpop.permute.xlu0 %842
    %844 = vrot.lane.b32.xlu0 %v612, 111
    %v845 = vpop.permute.xlu0 %844
    %846 = vrot.lane.b32.xlu0 %v614, 111
    %v847 = vpop.permute.xlu0 %846
    %848 = vrot.lane.b32.xlu0 %v609, 111
    %v849 = vpop.permute.xlu0 %848
    %850 = vrot.lane.b32.xlu0 %v611, 111
    %v851 = vpop.permute.xlu0 %850
    %852 = vrot.lane.b32.xlu0 %v613, 111
    %v853 = vpop.permute.xlu0 %852
    %854 = vrot.lane.b32.xlu0 %v615, 111
    %v855 = vpop.permute.xlu0 %854
    %v856 = vsel %vm382, %v841, %v849
    %v857 = vsel %vm382, %v843, %v851
    %v858 = vsel %vm382, %v845, %v853
    %v859 = vsel %vm382, %v847, %v855
    %v860 = vsel %vm382, %v849, %v841
    %v861 = vsel %vm382, %v851, %v843
    %v862 = vsel %vm382, %v853, %v845
    %v863 = vsel %vm382, %v855, %v847
    %v864 = vmul.f32 %v856, %v392
    %v865 = vmul.f32 %v860, %v393
    %v866 = vmul.f32 %v857, %v392
    %v867 = vmul.f32 %v861, %v393
    %v868 = vmul.f32 %v858, %v392
    %v869 = vmul.f32 %v862, %v393
    %v870 = vmul.f32 %v859, %v392
    %v871 = vmul.f32 %v863, %v393
    %v872 = vpack.c.bf16 %v642, %v640
    %v873 = vpack.c.bf16 %v643, %v641
    %v874 = vpack.c.bf16 %v646, %v644
    %v875 = vpack.c.bf16 %v647, %v645
    %v876 = vpack.c.bf16 %v674, %v672
    %v877 = vpack.c.bf16 %v675, %v673
    %v878 = vpack.c.bf16 %v678, %v676
    %v879 = vpack.c.bf16 %v679, %v677
    %v880 = vpack.c.bf16 %v706, %v704
    %v881 = vpack.c.bf16 %v707, %v705
    %v882 = vpack.c.bf16 %v710, %v708
    %v883 = vpack.c.bf16 %v711, %v709
    %v884 = vpack.c.bf16 %v738, %v736
    %v885 = vpack.c.bf16 %v739, %v737
    %v886 = vpack.c.bf16 %v742, %v740
    %v887 = vpack.c.bf16 %v743, %v741
    %v888 = vpack.c.bf16 %v610, %v608
    %v889 = vpack.c.bf16 %v611, %v609
    %v890 = vpack.c.bf16 %v614, %v612
    %v891 = vpack.c.bf16 %v615, %v613
    %v892 = vpack.c.bf16 %v770, %v768
    %v893 = vpack.c.bf16 %v771, %v769
    %v894 = vpack.c.bf16 %v774, %v772
    %v895 = vpack.c.bf16 %v775, %v773
    %v896 = vpack.c.bf16 %v802, %v800
    %v897 = vpack.c.bf16 %v803, %v801
    %v898 = vpack.c.bf16 %v806, %v804
    %v899 = vpack.c.bf16 %v807, %v805
    %v900 = vpack.c.bf16 %v834, %v832
    %v901 = vpack.c.bf16 %v835, %v833
    %v902 = vpack.c.bf16 %v838, %v836
    %v903 = vpack.c.bf16 %v839, %v837
    %v904 = vpack.c.bf16 %v866, %v864
    %v905 = vpack.c.bf16 %v867, %v865
    %v906 = vpack.c.bf16 %v870, %v868
    %v907 = vpack.c.bf16 %v871, %v869
    %909 = vset.pattern.permute.xlu0 0
    %910 = vperm.xlu0 %909, %v86
    %v911 = vpop.permute.xlu0 %910
    %914 = vset.pattern.permute.xlu0 0
    %915 = vperm.xlu0 %914, %v87
    %v916 = vpop.permute.xlu0 %915
    %919 = vset.pattern.permute.xlu0 0
    %920 = vperm.xlu0 %919, %v88
    %v921 = vpop.permute.xlu0 %920
    %924 = vset.pattern.permute.xlu0 0
    %925 = vperm.xlu0 %924, %v89
    %v926 = vpop.permute.xlu0 %925
    %v936 = vunpack.c.l.b16 %v70
    %v937 = vunpack.c.h.b16 %v70
    %v938 = vunpack.c.l.b16 %v71
    %v939 = vunpack.c.l.b16 %v72
    %v940 = vunpack.c.h.b16 %v72
    %v941 = vunpack.c.l.b16 %v73
    %v942 = vunpack.c.l.b16 %v74
    %v943 = vunpack.c.h.b16 %v74
    %v944 = vunpack.c.l.b16 %v75
    %v945 = vunpack.c.l.b16 %v76
    %v946 = vunpack.c.h.b16 %v76
    %v947 = vunpack.c.l.b16 %v77
    %v948 = vpack.c.b16 %v939, %v936
    %v949 = vpack.c.b16 %v940, %v937
    %v950 = vpack.c.b16 %v941, %v938
    %v951 = vpack.c.b16 %v945, %v942
    %v952 = vpack.c.b16 %v946, %v943
    %v953 = vpack.c.b16 %v947, %v944
    %v959 = vsel %vm470, %v950, 0
    %v962 = vsel %vm470, %v953, 0
    %964 = vmatpush.bf16.msra.mxu0 %v886
    %965 = vmatpush.bf16.msra.mxu0 %v884
    %966 = vmatpush.bf16.msra.mxu0 %v882
    %967 = vmatpush.bf16.msra.mxu0 %v880
    %968 = vmatpush.bf16.msra.mxu0 %v878
    %969 = vmatpush.bf16.msra.mxu0 %v876
    %970 = vmatpush.bf16.msra.mxu0 %v874
    %971 = vmatpush.bf16.msra.mxu0 %v872
    %972 = vmatmul.bf16.gmra.mxu0 %v948
    %v973 = vpop.f32.mrf.mxu0
    %v974 = vadd.f32 %v911, %v973
    %v975 = vpop.f32.mrf.mxu0
    %v976 = vadd.f32 %v916, %v975
    %977 = vmatmul.bf16.gmra.mxu0 %v951
    %v978 = vpop.f32.mrf.mxu0
    %v979 = vadd.f32 %v921, %v978
    %v980 = vpop.f32.mrf.mxu0
    %v981 = vadd.f32 %v926, %v980
    %982 = vdwg.mxu0
    %983 = vmatpush.bf16.msra.mxu0 %v902
    %984 = vmatpush.bf16.msra.mxu0 %v900
    %985 = vmatpush.bf16.msra.mxu0 %v898
    %986 = vmatpush.bf16.msra.mxu0 %v896
    %987 = vmatpush.bf16.msra.mxu0 %v894
    %988 = vmatpush.bf16.msra.mxu0 %v892
    %989 = vmatpush.bf16.msra.mxu0 %v890
    %990 = vmatpush.bf16.msra.mxu0 %v888
    %991 = vmatmul.bf16.gmra.mxu0 %v949
    %v992 = vpop.f32.mrf.mxu0
    %v993 = vadd.f32 %v974, %v992
    %v994 = vpop.f32.mrf.mxu0
    %v995 = vadd.f32 %v976, %v994
    %996 = vmatmul.bf16.gmra.mxu0 %v952
    %v997 = vpop.f32.mrf.mxu0
    %v998 = vadd.f32 %v979, %v997
    %v999 = vpop.f32.mrf.mxu0
    %v1000 = vadd.f32 %v981, %v999
    %1001 = vdwg.mxu0
    %1002 = vmatpush.bf16.msra.mxu0 0
    %1003 = vmatpush.bf16.msra.mxu0 0
    %1004 = vmatpush.bf16.msra.mxu0 0
    %1005 = vmatpush.bf16.msra.mxu0 0
    %1006 = vmatpush.bf16.msra.mxu0 0
    %1007 = vmatpush.bf16.msra.mxu0 0
    %1008 = vmatpush.bf16.msra.mxu0 %v906
    %1009 = vmatpush.bf16.msra.mxu0 %v904
    %1010 = vmatmul.bf16.gmra.mxu0 %v959
    %v1011 = vpop.f32.mrf.mxu0
    %v1012 = vadd.f32 %v993, %v1011
    %v1013 = vpop.f32.mrf.mxu0
    %v1014 = vadd.f32 %v995, %v1013
    %1015 = vmatmul.bf16.gmra.mxu0 %v962
    %v1016 = vpop.f32.mrf.mxu0
    %v1017 = vadd.f32 %v998, %v1016
    %v1018 = vpop.f32.mrf.mxu0
    %v1019 = vadd.f32 %v1000, %v1018
    %1020 = vdwg.mxu0
    %1021 = vmatpush.bf16.msra.mxu0 %v887
    %1022 = vmatpush.bf16.msra.mxu0 %v885
    %1023 = vmatpush.bf16.msra.mxu0 %v883
    %1024 = vmatpush.bf16.msra.mxu0 %v881
    %1025 = vmatpush.bf16.msra.mxu0 %v879
    %1026 = vmatpush.bf16.msra.mxu0 %v877
    %1027 = vmatpush.bf16.msra.mxu0 %v875
    %1028 = vmatpush.bf16.msra.mxu0 %v873
    %1029 = vmatmul.bf16.gmra.mxu0 %v948
    %v1030 = vpop.f32.mrf.mxu0
    %v1031 = vadd.f32 %v911, %v1030
    %v1032 = vpop.f32.mrf.mxu0
    %v1033 = vadd.f32 %v916, %v1032
    %1034 = vmatmul.bf16.gmra.mxu0 %v951
    %v1035 = vpop.f32.mrf.mxu0
    %v1036 = vadd.f32 %v921, %v1035
    %v1037 = vpop.f32.mrf.mxu0
    %v1038 = vadd.f32 %v926, %v1037
    %1039 = vdwg.mxu0
    %1040 = vmatpush.bf16.msra.mxu0 %v903
    %1041 = vmatpush.bf16.msra.mxu0 %v901
    %1042 = vmatpush.bf16.msra.mxu0 %v899
    %1043 = vmatpush.bf16.msra.mxu0 %v897
    %1044 = vmatpush.bf16.msra.mxu0 %v895
    %1045 = vmatpush.bf16.msra.mxu0 %v893
    %1046 = vmatpush.bf16.msra.mxu0 %v891
    %1047 = vmatpush.bf16.msra.mxu0 %v889
    %1048 = vmatmul.bf16.gmra.mxu0 %v949
    %v1049 = vpop.f32.mrf.mxu0
    %v1050 = vadd.f32 %v1031, %v1049
    %v1051 = vpop.f32.mrf.mxu0
    %v1052 = vadd.f32 %v1033, %v1051
    %1053 = vmatmul.bf16.gmra.mxu0 %v952
    %v1054 = vpop.f32.mrf.mxu0
    %v1055 = vadd.f32 %v1036, %v1054
    %v1056 = vpop.f32.mrf.mxu0
    %v1057 = vadd.f32 %v1038, %v1056
    %1058 = vdwg.mxu0
    %1059 = vmatpush.bf16.msra.mxu0 0
    %1060 = vmatpush.bf16.msra.mxu0 0
    %1061 = vmatpush.bf16.msra.mxu0 0
    %1062 = vmatpush.bf16.msra.mxu0 0
    %1063 = vmatpush.bf16.msra.mxu0 0
    %1064 = vmatpush.bf16.msra.mxu0 0
    %1065 = vmatpush.bf16.msra.mxu0 %v907
    %1066 = vmatpush.bf16.msra.mxu0 %v905
    %1067 = vmatmul.bf16.gmra.mxu0 %v959
    %v1068 = vpop.f32.mrf.mxu0
    %v1069 = vadd.f32 %v1050, %v1068
    %v1070 = vpop.f32.mrf.mxu0
    %v1071 = vadd.f32 %v1052, %v1070
    %1072 = vmatmul.bf16.gmra.mxu0 %v962
    %v1073 = vpop.f32.mrf.mxu0
    %v1074 = vadd.f32 %v1055, %v1073
    %v1075 = vpop.f32.mrf.mxu0
    %v1076 = vadd.f32 %v1057, %v1075
    %1077 = vdwg.mxu0
    %v1078 = vadd.f32 %v1012, %v1069
    %1079 = vadd.xlane.f32.xlu0 %v1078
    %v1080 = vpop.xlane.xlu0 %1079
    %v1081 = vadd.f32 %v1014, %v1071
    %1082 = vadd.xlane.f32.xlu0 %v1081
    %v1083 = vpop.xlane.xlu0 %1082
    %v1084 = vadd.f32 %v1017, %v1074
    %1085 = vadd.xlane.f32.xlu0 %v1084
    %v1086 = vpop.xlane.xlu0 %1085
    %v1087 = vadd.f32 %v1019, %v1076
    %1088 = vadd.xlane.f32.xlu0 %v1087
    %v1089 = vpop.xlane.xlu0 %1088
    %v1090 = vrcp.pop 256.0
    %v1091 = vmul.f32 256.0, %v1090
    %v1092 = vsub.f32 1.0, %v1091
    %v1093 = vmul.f32 %v1090, %v1092
    %v1094 = vadd.f32 %v1090, %v1093
    %vm1095 = vweird.f32 %v1090
    %v1096 = vsel %vm1095, %v1090, %v1094
    %v1097 = vmul.f32 %v1080, %v1096
    %v1098 = vmul.f32 %v1083, %v1096
    %v1099 = vmul.f32 %v1086, %v1096
    %v1100 = vmul.f32 %v1089, %v1096
    %v1101 = vld [vmem:[%s6] sm:$0xff]
    %v1102 = vld [vmem:[%s6 + $0x8] sm:$0xff]
    %v1103 = vld [vmem:[%s6 + $0x10] sm:$0xff]
    %v1104 = vld [vmem:[%s6 + $0x18] sm:$0xff]
    %v1105 = vmul.f32 %v1101, %v1097
    %v1106 = vmul.f32 %v1102, %v1098
    %v1107 = vmul.f32 %v1103, %v1099
    %v1108 = vmul.f32 %v1104, %v1100
    %vm1109 = vcmask 15360
    %v1110 = vsel %vm1109, %v1105, 0.0
    %v1111 = vsel %vm1109, %v1106, 0.0
    %v1112 = vadd.f32 %v1110, %v1111
    %v1113 = vsel %vm1109, %v1107, 0.0
    %v1114 = vadd.f32 %v1112, %v1113
    %v1115 = vsel %vm1109, %v1108, 0.0
    %v1116 = vadd.f32 %v1114, %v1115
    %v1117 = vrot.slane %v1116, 4
    %v1118 = vadd.f32 %v1116, %v1117
    %v1119 = vrot.slane %v1118, 2
    %v1120 = vadd.f32 %v1118, %v1119
    %v1121 = vrot.slane %v1120, 1
    %v1122 = vadd.f32 %v1120, %v1121
    %v1123 = vld [vmem:[%s7] sm:$0x1]
    %v1124 = vadd.f32 %v1122, %v1123
    %vm1125 = vcmp.ge.f32.partialorder %v1124, 0.0
    %v1126 = vstv %s53
    %v1127 = vmul.f32 %v1126, %v1124
    %v1128 = vsel %vm1125, %v1124, %v1127
    %v1129 = vld [vmem:[%s8] sm:$0xff]
    %v1130 = vld [vmem:[%s8 + $0x8] sm:$0xff]
    %v1131 = vld [vmem:[%s8 + $0x10] sm:$0xff]
    %v1132 = vld [vmem:[%s8 + $0x18] sm:$0xff]
    %v1133 = vperm.slane %v1128, 0
    %v1134 = vmul.f32 %v1129, %v1133
    %v1135 = vmul.f32 %v1130, %v1133
    %v1136 = vmul.f32 %v1131, %v1133
    %v1137 = vmul.f32 %v1132, %v1133
    %v1138 = vsel %vm1109, %v1134, 0.0
    %1139 = vadd.xlane.f32.xlu0 %v1138
    %v1140 = vpop.xlane.xlu0 %1139
    %v1141 = vsel %vm1109, %v1135, 0.0
    %1142 = vadd.xlane.f32.xlu0 %v1141
    %v1143 = vpop.xlane.xlu0 %1142
    %v1144 = vsel %vm1109, %v1136, 0.0
    %1145 = vadd.xlane.f32.xlu0 %v1144
    %v1146 = vpop.xlane.xlu0 %1145
    %v1147 = vsel %vm1109, %v1137, 0.0
    %1148 = vadd.xlane.f32.xlu0 %v1147
    %v1149 = vpop.xlane.xlu0 %1148
    %v1150 = vld [vmem:[%s9] sm:$0xff]
    %v1151 = vld [vmem:[%s9 + $0x8] sm:$0xff]
    %v1152 = vld [vmem:[%s9 + $0x10] sm:$0xff]
    %v1153 = vld [vmem:[%s9 + $0x18] sm:$0xff]
    %v1154 = vadd.f32 %v1140, %v1150
    %v1155 = vadd.f32 %v1143, %v1151
    %v1156 = vadd.f32 %v1146, %v1152
    %v1157 = vadd.f32 %v1149, %v1153
    %v1158 = vsub.f32 0.0, %v1154
    %v1159 = vsub.f32 0.0, %v1155
    %v1160 = vsub.f32 0.0, %v1156
    %v1161 = vsub.f32 0.0, %v1157
    %v1162 = vmul.f32 %v1158, 1.442695
    %v1163 = vpow.pop %v1162
    %v1164 = vmul.f32 %v1159, 1.442695
    %v1165 = vpow.pop %v1164
    %v1166 = vmul.f32 %v1160, 1.442695
    %v1167 = vpow.pop %v1166
    %v1168 = vmul.f32 %v1161, 1.442695
    %v1169 = vpow.pop %v1168
    %v1170 = vadd.f32 %v1163, 1.0
    %v1171 = vadd.f32 %v1165, 1.0
    %v1172 = vadd.f32 %v1167, 1.0
    %v1173 = vadd.f32 %v1169, 1.0
    %v1174 = vrcp.pop %v1170
    %v1175 = vrcp.pop %v1171
    %v1176 = vrcp.pop %v1172
    %v1177 = vrcp.pop %v1173
    %1179 = vset.pattern.permute.xlu0 0
    %1180 = vperm.xlu0 %1179, %v1174
    %v1181 = vpop.permute.xlu0 %1180
    %1184 = vset.pattern.permute.xlu0 0
    %1185 = vperm.xlu0 %1184, %v1175
    %v1186 = vpop.permute.xlu0 %1185
    %1189 = vset.pattern.permute.xlu0 0
    %1190 = vperm.xlu0 %1189, %v1176
    %v1191 = vpop.permute.xlu0 %1190
    %1194 = vset.pattern.permute.xlu0 0
    %1195 = vperm.xlu0 %1194, %v1177
    %v1196 = vpop.permute.xlu0 %1195
    %v1198 = vmul.f32 %v1012, %v1181
    %v1199 = vmul.f32 %v1069, %v1181
    %v1200 = vmul.f32 %v1014, %v1186
    %v1201 = vmul.f32 %v1071, %v1186
    %v1202 = vmul.f32 %v1017, %v1191
    %v1203 = vmul.f32 %v1074, %v1191
    %v1204 = vmul.f32 %v1019, %v1196
    %v1205 = vmul.f32 %v1076, %v1196
    %v1206 = vadd.f32 %v1198, %v90
    %v1207 = vadd.f32 %v1199, %v91
    %v1208 = vadd.f32 %v1200, %v92
    %v1209 = vadd.f32 %v1201, %v93
    %v1210 = vadd.f32 %v1202, %v94
    %v1211 = vadd.f32 %v1203, %v95
    %v1212 = vadd.f32 %v1204, %v96
    %v1213 = vadd.f32 %v1205, %v97
    %vm1214 = vcmp.ge.f32.partialorder %v1206, 0.0
    %vm1215 = vcmp.ge.f32.partialorder %v1207, 0.0
    %vm1216 = vcmp.ge.f32.partialorder %v1208, 0.0
    %vm1217 = vcmp.ge.f32.partialorder %v1209, 0.0
    %vm1218 = vcmp.ge.f32.partialorder %v1210, 0.0
    %vm1219 = vcmp.ge.f32.partialorder %v1211, 0.0
    %vm1220 = vcmp.ge.f32.partialorder %v1212, 0.0
    %vm1221 = vcmp.ge.f32.partialorder %v1213, 0.0
    %v1222 = vmul.f32 %v599, %v1206
    %v1223 = vmul.f32 %v599, %v1207
    %v1224 = vmul.f32 %v599, %v1208
    %v1225 = vmul.f32 %v599, %v1209
    %v1226 = vmul.f32 %v599, %v1210
    %v1227 = vmul.f32 %v599, %v1211
    %v1228 = vmul.f32 %v599, %v1212
    %v1229 = vmul.f32 %v599, %v1213
    %v1230 = vsel %vm1214, %v1206, %v1222
    %v1231 = vsel %vm1215, %v1207, %v1223
    %v1232 = vsel %vm1216, %v1208, %v1224
    %v1233 = vsel %vm1217, %v1209, %v1225
    %v1234 = vsel %vm1218, %v1210, %v1226
    %v1235 = vsel %vm1219, %v1211, %v1227
    %v1236 = vsel %vm1220, %v1212, %v1228
    %v1237 = vsel %vm1221, %v1213, %v1229
    %1238 = vst [vmem:[%s11] sm:$0xff] %v1230
    %1239 = vst [vmem:[%s11 + $0x8] sm:$0xff] %v1231
    %1240 = vst [vmem:[%s11 + $0x10] sm:$0xff] %v1232
    %1241 = vst [vmem:[%s11 + $0x18] sm:$0xff] %v1233
    %1242 = vst [vmem:[%s11 + $0x20] sm:$0xff] %v1234
    %1243 = vst [vmem:[%s11 + $0x28] sm:$0xff] %v1235
    %1244 = vst [vmem:[%s11 + $0x30] sm:$0xff] %v1236
    %1245 = vst [vmem:[%s11 + $0x38] sm:$0xff] %v1237
    %s1246 = scalar_lea.vmem %s0, 64
    %v1247 = vld [vmem:[%s1246] sm:$0xff]
    %v1248 = vld [vmem:[%s1246 + $0x8] sm:$0xff]
    %v1249 = vld [vmem:[%s1246 + $0x10] sm:$0xff]
    %v1250 = vld [vmem:[%s1246 + $0x18] sm:$0xff]
    %v1251 = vld [vmem:[%s1246 + $0x20] sm:$0xff]
    %v1252 = vld [vmem:[%s1246 + $0x28] sm:$0xff]
    %v1253 = vld [vmem:[%s1246 + $0x30] sm:$0xff]
    %v1254 = vld [vmem:[%s1246 + $0x38] sm:$0xff]
    %1255 = vrot.lane.b32.xlu0 %v1247, 17
    %v1256 = vpop.permute.xlu0 %1255
    %1257 = vrot.lane.b32.xlu0 %v1249, 17
    %v1258 = vpop.permute.xlu0 %1257
    %1259 = vrot.lane.b32.xlu0 %v1251, 17
    %v1260 = vpop.permute.xlu0 %1259
    %1261 = vrot.lane.b32.xlu0 %v1253, 17
    %v1262 = vpop.permute.xlu0 %1261
    %1263 = vrot.lane.b32.xlu0 %v1248, 17
    %v1264 = vpop.permute.xlu0 %1263
    %1265 = vrot.lane.b32.xlu0 %v1250, 17
    %v1266 = vpop.permute.xlu0 %1265
    %1267 = vrot.lane.b32.xlu0 %v1252, 17
    %v1268 = vpop.permute.xlu0 %1267
    %1269 = vrot.lane.b32.xlu0 %v1254, 17
    %v1270 = vpop.permute.xlu0 %1269
    %v1271 = vsel %vm116, %v1256, %v1264
    %v1272 = vsel %vm116, %v1258, %v1266
    %v1273 = vsel %vm116, %v1260, %v1268
    %v1274 = vsel %vm116, %v1262, %v1270
    %v1275 = vsel %vm116, %v1264, %v1256
    %v1276 = vsel %vm116, %v1266, %v1258
    %v1277 = vsel %vm116, %v1268, %v1260
    %v1278 = vsel %vm116, %v1270, %v1262
    %v1279 = vmul.f32 %v1275, %v126
    %v1280 = vmul.f32 %v1271, %v127
    %v1281 = vmul.f32 %v1276, %v126
    %v1282 = vmul.f32 %v1272, %v127
    %v1283 = vmul.f32 %v1277, %v126
    %v1284 = vmul.f32 %v1273, %v127
    %v1285 = vmul.f32 %v1278, %v126
    %v1286 = vmul.f32 %v1274, %v127
    %1287 = vrot.lane.b32.xlu0 %v1247, 16
    %v1288 = vpop.permute.xlu0 %1287
    %1289 = vrot.lane.b32.xlu0 %v1249, 16
    %v1290 = vpop.permute.xlu0 %1289
    %1291 = vrot.lane.b32.xlu0 %v1251, 16
    %v1292 = vpop.permute.xlu0 %1291
    %1293 = vrot.lane.b32.xlu0 %v1253, 16
    %v1294 = vpop.permute.xlu0 %1293
    %1295 = vrot.lane.b32.xlu0 %v1248, 16
    %v1296 = vpop.permute.xlu0 %1295
    %1297 = vrot.lane.b32.xlu0 %v1250, 16
    %v1298 = vpop.permute.xlu0 %1297
    %1299 = vrot.lane.b32.xlu0 %v1252, 16
    %v1300 = vpop.permute.xlu0 %1299
    %1301 = vrot.lane.b32.xlu0 %v1254, 16
    %v1302 = vpop.permute.xlu0 %1301
    %v1303 = vsel %vm154, %v1288, %v1296
    %v1304 = vsel %vm154, %v1290, %v1298
    %v1305 = vsel %vm154, %v1292, %v1300
    %v1306 = vsel %vm154, %v1294, %v1302
    %v1307 = vsel %vm154, %v1296, %v1288
    %v1308 = vsel %vm154, %v1298, %v1290
    %v1309 = vsel %vm154, %v1300, %v1292
    %v1310 = vsel %vm154, %v1302, %v1294
    %v1311 = vmul.f32 %v1307, %v164
    %v1312 = vmul.f32 %v1303, %v165
    %v1313 = vmul.f32 %v1308, %v164
    %v1314 = vmul.f32 %v1304, %v165
    %v1315 = vmul.f32 %v1309, %v164
    %v1316 = vmul.f32 %v1305, %v165
    %v1317 = vmul.f32 %v1310, %v164
    %v1318 = vmul.f32 %v1306, %v165
    %1319 = vrot.lane.b32.xlu0 %v1247, 15
    %v1320 = vpop.permute.xlu0 %1319
    %1321 = vrot.lane.b32.xlu0 %v1249, 15
    %v1322 = vpop.permute.xlu0 %1321
    %1323 = vrot.lane.b32.xlu0 %v1251, 15
    %v1324 = vpop.permute.xlu0 %1323
    %1325 = vrot.lane.b32.xlu0 %v1253, 15
    %v1326 = vpop.permute.xlu0 %1325
    %1327 = vrot.lane.b32.xlu0 %v1248, 15
    %v1328 = vpop.permute.xlu0 %1327
    %1329 = vrot.lane.b32.xlu0 %v1250, 15
    %v1330 = vpop.permute.xlu0 %1329
    %1331 = vrot.lane.b32.xlu0 %v1252, 15
    %v1332 = vpop.permute.xlu0 %1331
    %1333 = vrot.lane.b32.xlu0 %v1254, 15
    %v1334 = vpop.permute.xlu0 %1333
    %v1335 = vsel %vm192, %v1320, %v1328
    %v1336 = vsel %vm192, %v1322, %v1330
    %v1337 = vsel %vm192, %v1324, %v1332
    %v1338 = vsel %vm192, %v1326, %v1334
    %v1339 = vsel %vm192, %v1328, %v1320
    %v1340 = vsel %vm192, %v1330, %v1322
    %v1341 = vsel %vm192, %v1332, %v1324
    %v1342 = vsel %vm192, %v1334, %v1326
    %v1343 = vmul.f32 %v1339, %v202
    %v1344 = vmul.f32 %v1335, %v203
    %v1345 = vmul.f32 %v1340, %v202
    %v1346 = vmul.f32 %v1336, %v203
    %v1347 = vmul.f32 %v1341, %v202
    %v1348 = vmul.f32 %v1337, %v203
    %v1349 = vmul.f32 %v1342, %v202
    %v1350 = vmul.f32 %v1338, %v203
    %1351 = vrot.lane.b32.xlu0 %v1247, 1
    %v1352 = vpop.permute.xlu0 %1351
    %1353 = vrot.lane.b32.xlu0 %v1249, 1
    %v1354 = vpop.permute.xlu0 %1353
    %1355 = vrot.lane.b32.xlu0 %v1251, 1
    %v1356 = vpop.permute.xlu0 %1355
    %1357 = vrot.lane.b32.xlu0 %v1253, 1
    %v1358 = vpop.permute.xlu0 %1357
    %1359 = vrot.lane.b32.xlu0 %v1248, 1
    %v1360 = vpop.permute.xlu0 %1359
    %1361 = vrot.lane.b32.xlu0 %v1250, 1
    %v1362 = vpop.permute.xlu0 %1361
    %1363 = vrot.lane.b32.xlu0 %v1252, 1
    %v1364 = vpop.permute.xlu0 %1363
    %1365 = vrot.lane.b32.xlu0 %v1254, 1
    %v1366 = vpop.permute.xlu0 %1365
    %v1367 = vsel %vm230, %v1352, %v1360
    %v1368 = vsel %vm230, %v1354, %v1362
    %v1369 = vsel %vm230, %v1356, %v1364
    %v1370 = vsel %vm230, %v1358, %v1366
    %v1371 = vsel %vm230, %v1360, %v1352
    %v1372 = vsel %vm230, %v1362, %v1354
    %v1373 = vsel %vm230, %v1364, %v1356
    %v1374 = vsel %vm230, %v1366, %v1358
    %v1375 = vmul.f32 %v1371, %v240
    %v1376 = vmul.f32 %v1367, %v241
    %v1377 = vmul.f32 %v1372, %v240
    %v1378 = vmul.f32 %v1368, %v241
    %v1379 = vmul.f32 %v1373, %v240
    %v1380 = vmul.f32 %v1369, %v241
    %v1381 = vmul.f32 %v1374, %v240
    %v1382 = vmul.f32 %v1370, %v241
    %1383 = vrot.lane.b32.xlu0 %v1247, 127
    %v1384 = vpop.permute.xlu0 %1383
    %1385 = vrot.lane.b32.xlu0 %v1249, 127
    %v1386 = vpop.permute.xlu0 %1385
    %1387 = vrot.lane.b32.xlu0 %v1251, 127
    %v1388 = vpop.permute.xlu0 %1387
    %1389 = vrot.lane.b32.xlu0 %v1253, 127
    %v1390 = vpop.permute.xlu0 %1389
    %1391 = vrot.lane.b32.xlu0 %v1248, 127
    %v1392 = vpop.permute.xlu0 %1391
    %1393 = vrot.lane.b32.xlu0 %v1250, 127
    %v1394 = vpop.permute.xlu0 %1393
    %1395 = vrot.lane.b32.xlu0 %v1252, 127
    %v1396 = vpop.permute.xlu0 %1395
    %1397 = vrot.lane.b32.xlu0 %v1254, 127
    %v1398 = vpop.permute.xlu0 %1397
    %v1399 = vsel %vm268, %v1384, %v1392
    %v1400 = vsel %vm268, %v1386, %v1394
    %v1401 = vsel %vm268, %v1388, %v1396
    %v1402 = vsel %vm268, %v1390, %v1398
    %v1403 = vsel %vm268, %v1392, %v1384
    %v1404 = vsel %vm268, %v1394, %v1386
    %v1405 = vsel %vm268, %v1396, %v1388
    %v1406 = vsel %vm268, %v1398, %v1390
    %v1407 = vmul.f32 %v1399, %v278
    %v1408 = vmul.f32 %v1403, %v279
    %v1409 = vmul.f32 %v1400, %v278
    %v1410 = vmul.f32 %v1404, %v279
    %v1411 = vmul.f32 %v1401, %v278
    %v1412 = vmul.f32 %v1405, %v279
    %v1413 = vmul.f32 %v1402, %v278
    %v1414 = vmul.f32 %v1406, %v279
    %1415 = vrot.lane.b32.xlu0 %v1247, 113
    %v1416 = vpop.permute.xlu0 %1415
    %1417 = vrot.lane.b32.xlu0 %v1249, 113
    %v1418 = vpop.permute.xlu0 %1417
    %1419 = vrot.lane.b32.xlu0 %v1251, 113
    %v1420 = vpop.permute.xlu0 %1419
    %1421 = vrot.lane.b32.xlu0 %v1253, 113
    %v1422 = vpop.permute.xlu0 %1421
    %1423 = vrot.lane.b32.xlu0 %v1248, 113
    %v1424 = vpop.permute.xlu0 %1423
    %1425 = vrot.lane.b32.xlu0 %v1250, 113
    %v1426 = vpop.permute.xlu0 %1425
    %1427 = vrot.lane.b32.xlu0 %v1252, 113
    %v1428 = vpop.permute.xlu0 %1427
    %1429 = vrot.lane.b32.xlu0 %v1254, 113
    %v1430 = vpop.permute.xlu0 %1429
    %v1431 = vsel %vm306, %v1416, %v1424
    %v1432 = vsel %vm306, %v1418, %v1426
    %v1433 = vsel %vm306, %v1420, %v1428
    %v1434 = vsel %vm306, %v1422, %v1430
    %v1435 = vsel %vm306, %v1424, %v1416
    %v1436 = vsel %vm306, %v1426, %v1418
    %v1437 = vsel %vm306, %v1428, %v1420
    %v1438 = vsel %vm306, %v1430, %v1422
    %v1439 = vmul.f32 %v1431, %v316
    %v1440 = vmul.f32 %v1435, %v317
    %v1441 = vmul.f32 %v1432, %v316
    %v1442 = vmul.f32 %v1436, %v317
    %v1443 = vmul.f32 %v1433, %v316
    %v1444 = vmul.f32 %v1437, %v317
    %v1445 = vmul.f32 %v1434, %v316
    %v1446 = vmul.f32 %v1438, %v317
    %1447 = vrot.lane.b32.xlu0 %v1247, 112
    %v1448 = vpop.permute.xlu0 %1447
    %1449 = vrot.lane.b32.xlu0 %v1249, 112
    %v1450 = vpop.permute.xlu0 %1449
    %1451 = vrot.lane.b32.xlu0 %v1251, 112
    %v1452 = vpop.permute.xlu0 %1451
    %1453 = vrot.lane.b32.xlu0 %v1253, 112
    %v1454 = vpop.permute.xlu0 %1453
    %1455 = vrot.lane.b32.xlu0 %v1248, 112
    %v1456 = vpop.permute.xlu0 %1455
    %1457 = vrot.lane.b32.xlu0 %v1250, 112
    %v1458 = vpop.permute.xlu0 %1457
    %1459 = vrot.lane.b32.xlu0 %v1252, 112
    %v1460 = vpop.permute.xlu0 %1459
    %1461 = vrot.lane.b32.xlu0 %v1254, 112
    %v1462 = vpop.permute.xlu0 %1461
    %v1463 = vsel %vm344, %v1448, %v1456
    %v1464 = vsel %vm344, %v1450, %v1458
    %v1465 = vsel %vm344, %v1452, %v1460
    %v1466 = vsel %vm344, %v1454, %v1462
    %v1467 = vsel %vm344, %v1456, %v1448
    %v1468 = vsel %vm344, %v1458, %v1450
    %v1469 = vsel %vm344, %v1460, %v1452
    %v1470 = vsel %vm344, %v1462, %v1454
    %v1471 = vmul.f32 %v1463, %v354
    %v1472 = vmul.f32 %v1467, %v355
    %v1473 = vmul.f32 %v1464, %v354
    %v1474 = vmul.f32 %v1468, %v355
    %v1475 = vmul.f32 %v1465, %v354
    %v1476 = vmul.f32 %v1469, %v355
    %v1477 = vmul.f32 %v1466, %v354
    %v1478 = vmul.f32 %v1470, %v355
    %1479 = vrot.lane.b32.xlu0 %v1247, 111
    %v1480 = vpop.permute.xlu0 %1479
    %1481 = vrot.lane.b32.xlu0 %v1249, 111
    %v1482 = vpop.permute.xlu0 %1481
    %1483 = vrot.lane.b32.xlu0 %v1251, 111
    %v1484 = vpop.permute.xlu0 %1483
    %1485 = vrot.lane.b32.xlu0 %v1253, 111
    %v1486 = vpop.permute.xlu0 %1485
    %1487 = vrot.lane.b32.xlu0 %v1248, 111
    %v1488 = vpop.permute.xlu0 %1487
    %1489 = vrot.lane.b32.xlu0 %v1250, 111
    %v1490 = vpop.permute.xlu0 %1489
    %1491 = vrot.lane.b32.xlu0 %v1252, 111
    %v1492 = vpop.permute.xlu0 %1491
    %1493 = vrot.lane.b32.xlu0 %v1254, 111
    %v1494 = vpop.permute.xlu0 %1493
    %v1495 = vsel %vm382, %v1480, %v1488
    %v1496 = vsel %vm382, %v1482, %v1490
    %v1497 = vsel %vm382, %v1484, %v1492
    %v1498 = vsel %vm382, %v1486, %v1494
    %v1499 = vsel %vm382, %v1488, %v1480
    %v1500 = vsel %vm382, %v1490, %v1482
    %v1501 = vsel %vm382, %v1492, %v1484
    %v1502 = vsel %vm382, %v1494, %v1486
    %v1503 = vmul.f32 %v1495, %v392
    %v1504 = vmul.f32 %v1499, %v393
    %v1505 = vmul.f32 %v1496, %v392
    %v1506 = vmul.f32 %v1500, %v393
    %v1507 = vmul.f32 %v1497, %v392
    %v1508 = vmul.f32 %v1501, %v393
    %v1509 = vmul.f32 %v1498, %v392
    %v1510 = vmul.f32 %v1502, %v393
    %v1511 = vpack.c.bf16 %v1281, %v1279
    %v1512 = vpack.c.bf16 %v1282, %v1280
    %v1513 = vpack.c.bf16 %v1285, %v1283
    %v1514 = vpack.c.bf16 %v1286, %v1284
    %v1515 = vpack.c.bf16 %v1313, %v1311
    %v1516 = vpack.c.bf16 %v1314, %v1312
    %v1517 = vpack.c.bf16 %v1317, %v1315
    %v1518 = vpack.c.bf16 %v1318, %v1316
    %v1519 = vpack.c.bf16 %v1345, %v1343
    %v1520 = vpack.c.bf16 %v1346, %v1344
    %v1521 = vpack.c.bf16 %v1349, %v1347
    %v1522 = vpack.c.bf16 %v1350, %v1348
    %v1523 = vpack.c.bf16 %v1377, %v1375
    %v1524 = vpack.c.bf16 %v1378, %v1376
    %v1525 = vpack.c.bf16 %v1381, %v1379
    %v1526 = vpack.c.bf16 %v1382, %v1380
    %v1527 = vpack.c.bf16 %v1249, %v1247
    %v1528 = vpack.c.bf16 %v1250, %v1248
    %v1529 = vpack.c.bf16 %v1253, %v1251
    %v1530 = vpack.c.bf16 %v1254, %v1252
    %v1531 = vpack.c.bf16 %v1409, %v1407
    %v1532 = vpack.c.bf16 %v1410, %v1408
    %v1533 = vpack.c.bf16 %v1413, %v1411
    %v1534 = vpack.c.bf16 %v1414, %v1412
    %v1535 = vpack.c.bf16 %v1441, %v1439
    %v1536 = vpack.c.bf16 %v1442, %v1440
    %v1537 = vpack.c.bf16 %v1445, %v1443
    %v1538 = vpack.c.bf16 %v1446, %v1444
    %v1539 = vpack.c.bf16 %v1473, %v1471
    %v1540 = vpack.c.bf16 %v1474, %v1472
    %v1541 = vpack.c.bf16 %v1477, %v1475
    %v1542 = vpack.c.bf16 %v1478, %v1476
    %v1543 = vpack.c.bf16 %v1505, %v1503
    %v1544 = vpack.c.bf16 %v1506, %v1504
    %v1545 = vpack.c.bf16 %v1509, %v1507
    %v1546 = vpack.c.bf16 %v1510, %v1508
    %1547 = vmatpush.bf16.msra.mxu0 %v1525
    %1548 = vmatpush.bf16.msra.mxu0 %v1523
    %1549 = vmatpush.bf16.msra.mxu0 %v1521
    %1550 = vmatpush.bf16.msra.mxu0 %v1519
    %1551 = vmatpush.bf16.msra.mxu0 %v1517
    %1552 = vmatpush.bf16.msra.mxu0 %v1515
    %1553 = vmatpush.bf16.msra.mxu0 %v1513
    %1554 = vmatpush.bf16.msra.mxu0 %v1511
    %1555 = vmatmul.bf16.gmra.mxu0 %v460
    %v1556 = vpop.f32.mrf.mxu0
    %v1557 = vadd.f32 %v78, %v1556
    %v1558 = vpop.f32.mrf.mxu0
    %v1559 = vadd.f32 %v80, %v1558
    %1560 = vmatmul.bf16.gmra.mxu0 %v463
    %v1561 = vpop.f32.mrf.mxu0
    %v1562 = vadd.f32 %v82, %v1561
    %v1563 = vpop.f32.mrf.mxu0
    %v1564 = vadd.f32 %v84, %v1563
    %1565 = vdwg.mxu0
    %1566 = vmatpush.bf16.msra.mxu0 %v1541
    %1567 = vmatpush.bf16.msra.mxu0 %v1539
    %1568 = vmatpush.bf16.msra.mxu0 %v1537
    %1569 = vmatpush.bf16.msra.mxu0 %v1535
    %1570 = vmatpush.bf16.msra.mxu0 %v1533
    %1571 = vmatpush.bf16.msra.mxu0 %v1531
    %1572 = vmatpush.bf16.msra.mxu0 %v1529
    %1573 = vmatpush.bf16.msra.mxu0 %v1527
    %1574 = vmatmul.bf16.gmra.mxu0 %v461
    %v1575 = vpop.f32.mrf.mxu0
    %v1576 = vadd.f32 %v1557, %v1575
    %v1577 = vpop.f32.mrf.mxu0
    %v1578 = vadd.f32 %v1559, %v1577
    %1579 = vmatmul.bf16.gmra.mxu0 %v464
    %v1580 = vpop.f32.mrf.mxu0
    %v1581 = vadd.f32 %v1562, %v1580
    %v1582 = vpop.f32.mrf.mxu0
    %v1583 = vadd.f32 %v1564, %v1582
    %1584 = vdwg.mxu0
    %1585 = vmatpush.bf16.msra.mxu0 0
    %1586 = vmatpush.bf16.msra.mxu0 0
    %1587 = vmatpush.bf16.msra.mxu0 0
    %1588 = vmatpush.bf16.msra.mxu0 0
    %1589 = vmatpush.bf16.msra.mxu0 0
    %1590 = vmatpush.bf16.msra.mxu0 0
    %1591 = vmatpush.bf16.msra.mxu0 %v1545
    %1592 = vmatpush.bf16.msra.mxu0 %v1543
    %1593 = vmatmul.bf16.gmra.mxu0 %v472
    %v1594 = vpop.f32.mrf.mxu0
    %v1595 = vadd.f32 %v1576, %v1594
    %v1596 = vpop.f32.mrf.mxu0
    %v1597 = vadd.f32 %v1578, %v1596
    %1598 = vmatmul.bf16.gmra.mxu0 %v475
    %v1599 = vpop.f32.mrf.mxu0
    %v1600 = vadd.f32 %v1581, %v1599
    %v1601 = vpop.f32.mrf.mxu0
    %v1602 = vadd.f32 %v1583, %v1601
    %1603 = vdwg.mxu0
    %1604 = vmatpush.bf16.msra.mxu0 %v1526
    %1605 = vmatpush.bf16.msra.mxu0 %v1524
    %1606 = vmatpush.bf16.msra.mxu0 %v1522
    %1607 = vmatpush.bf16.msra.mxu0 %v1520
    %1608 = vmatpush.bf16.msra.mxu0 %v1518
    %1609 = vmatpush.bf16.msra.mxu0 %v1516
    %1610 = vmatpush.bf16.msra.mxu0 %v1514
    %1611 = vmatpush.bf16.msra.mxu0 %v1512
    %1612 = vmatmul.bf16.gmra.mxu0 %v460
    %v1613 = vpop.f32.mrf.mxu0
    %v1614 = vadd.f32 %v79, %v1613
    %v1615 = vpop.f32.mrf.mxu0
    %v1616 = vadd.f32 %v81, %v1615
    %1617 = vmatmul.bf16.gmra.mxu0 %v463
    %v1618 = vpop.f32.mrf.mxu0
    %v1619 = vadd.f32 %v83, %v1618
    %v1620 = vpop.f32.mrf.mxu0
    %v1621 = vadd.f32 %v85, %v1620
    %1622 = vdwg.mxu0
    %1623 = vmatpush.bf16.msra.mxu0 %v1542
    %1624 = vmatpush.bf16.msra.mxu0 %v1540
    %1625 = vmatpush.bf16.msra.mxu0 %v1538
    %1626 = vmatpush.bf16.msra.mxu0 %v1536
    %1627 = vmatpush.bf16.msra.mxu0 %v1534
    %1628 = vmatpush.bf16.msra.mxu0 %v1532
    %1629 = vmatpush.bf16.msra.mxu0 %v1530
    %1630 = vmatpush.bf16.msra.mxu0 %v1528
    %1631 = vmatmul.bf16.gmra.mxu0 %v461
    %v1632 = vpop.f32.mrf.mxu0
    %v1633 = vadd.f32 %v1614, %v1632
    %v1634 = vpop.f32.mrf.mxu0
    %v1635 = vadd.f32 %v1616, %v1634
    %1636 = vmatmul.bf16.gmra.mxu0 %v464
    %v1637 = vpop.f32.mrf.mxu0
    %v1638 = vadd.f32 %v1619, %v1637
    %v1639 = vpop.f32.mrf.mxu0
    %v1640 = vadd.f32 %v1621, %v1639
    %1641 = vdwg.mxu0
    %1642 = vmatpush.bf16.msra.mxu0 0
    %1643 = vmatpush.bf16.msra.mxu0 0
    %1644 = vmatpush.bf16.msra.mxu0 0
    %1645 = vmatpush.bf16.msra.mxu0 0
    %1646 = vmatpush.bf16.msra.mxu0 0
    %1647 = vmatpush.bf16.msra.mxu0 0
    %1648 = vmatpush.bf16.msra.mxu0 %v1546
    %1649 = vmatpush.bf16.msra.mxu0 %v1544
    %1650 = vmatmul.bf16.gmra.mxu0 %v472
    %v1651 = vpop.f32.mrf.mxu0
    %v1652 = vadd.f32 %v1633, %v1651
    %v1653 = vpop.f32.mrf.mxu0
    %v1654 = vadd.f32 %v1635, %v1653
    %1655 = vmatmul.bf16.gmra.mxu0 %v475
    %v1656 = vpop.f32.mrf.mxu0
    %v1657 = vadd.f32 %v1638, %v1656
    %v1658 = vpop.f32.mrf.mxu0
    %v1659 = vadd.f32 %v1640, %v1658
    %1660 = vdwg.mxu0
    %vm1661 = vcmp.ge.f32.partialorder %v1595, 0.0
    %vm1662 = vcmp.ge.f32.partialorder %v1652, 0.0
    %vm1663 = vcmp.ge.f32.partialorder %v1597, 0.0
    %vm1664 = vcmp.ge.f32.partialorder %v1654, 0.0
    %vm1665 = vcmp.ge.f32.partialorder %v1600, 0.0
    %vm1666 = vcmp.ge.f32.partialorder %v1657, 0.0
    %vm1667 = vcmp.ge.f32.partialorder %v1602, 0.0
    %vm1668 = vcmp.ge.f32.partialorder %v1659, 0.0
    %v1669 = vmul.f32 %v599, %v1595
    %v1670 = vmul.f32 %v599, %v1652
    %v1671 = vmul.f32 %v599, %v1597
    %v1672 = vmul.f32 %v599, %v1654
    %v1673 = vmul.f32 %v599, %v1600
    %v1674 = vmul.f32 %v599, %v1657
    %v1675 = vmul.f32 %v599, %v1602
    %v1676 = vmul.f32 %v599, %v1659
    %v1677 = vsel %vm1661, %v1595, %v1669
    %v1678 = vsel %vm1662, %v1652, %v1670
    %v1679 = vsel %vm1663, %v1597, %v1671
    %v1680 = vsel %vm1664, %v1654, %v1672
    %v1681 = vsel %vm1665, %v1600, %v1673
    %v1682 = vsel %vm1666, %v1657, %v1674
    %v1683 = vsel %vm1667, %v1602, %v1675
    %v1684 = vsel %vm1668, %v1659, %v1676
    %1685 = vrot.lane.b32.xlu0 %v1677, 17
    %v1686 = vpop.permute.xlu0 %1685
    %1687 = vrot.lane.b32.xlu0 %v1679, 17
    %v1688 = vpop.permute.xlu0 %1687
    %1689 = vrot.lane.b32.xlu0 %v1681, 17
    %v1690 = vpop.permute.xlu0 %1689
    %1691 = vrot.lane.b32.xlu0 %v1683, 17
    %v1692 = vpop.permute.xlu0 %1691
    %1693 = vrot.lane.b32.xlu0 %v1678, 17
    %v1694 = vpop.permute.xlu0 %1693
    %1695 = vrot.lane.b32.xlu0 %v1680, 17
    %v1696 = vpop.permute.xlu0 %1695
    %1697 = vrot.lane.b32.xlu0 %v1682, 17
    %v1698 = vpop.permute.xlu0 %1697
    %1699 = vrot.lane.b32.xlu0 %v1684, 17
    %v1700 = vpop.permute.xlu0 %1699
    %v1701 = vsel %vm116, %v1686, %v1694
    %v1702 = vsel %vm116, %v1688, %v1696
    %v1703 = vsel %vm116, %v1690, %v1698
    %v1704 = vsel %vm116, %v1692, %v1700
    %v1705 = vsel %vm116, %v1694, %v1686
    %v1706 = vsel %vm116, %v1696, %v1688
    %v1707 = vsel %vm116, %v1698, %v1690
    %v1708 = vsel %vm116, %v1700, %v1692
    %v1709 = vmul.f32 %v1705, %v126
    %v1710 = vmul.f32 %v1701, %v127
    %v1711 = vmul.f32 %v1706, %v126
    %v1712 = vmul.f32 %v1702, %v127
    %v1713 = vmul.f32 %v1707, %v126
    %v1714 = vmul.f32 %v1703, %v127
    %v1715 = vmul.f32 %v1708, %v126
    %v1716 = vmul.f32 %v1704, %v127
    %1717 = vrot.lane.b32.xlu0 %v1677, 16
    %v1718 = vpop.permute.xlu0 %1717
    %1719 = vrot.lane.b32.xlu0 %v1679, 16
    %v1720 = vpop.permute.xlu0 %1719
    %1721 = vrot.lane.b32.xlu0 %v1681, 16
    %v1722 = vpop.permute.xlu0 %1721
    %1723 = vrot.lane.b32.xlu0 %v1683, 16
    %v1724 = vpop.permute.xlu0 %1723
    %1725 = vrot.lane.b32.xlu0 %v1678, 16
    %v1726 = vpop.permute.xlu0 %1725
    %1727 = vrot.lane.b32.xlu0 %v1680, 16
    %v1728 = vpop.permute.xlu0 %1727
    %1729 = vrot.lane.b32.xlu0 %v1682, 16
    %v1730 = vpop.permute.xlu0 %1729
    %1731 = vrot.lane.b32.xlu0 %v1684, 16
    %v1732 = vpop.permute.xlu0 %1731
    %v1733 = vsel %vm154, %v1718, %v1726
    %v1734 = vsel %vm154, %v1720, %v1728
    %v1735 = vsel %vm154, %v1722, %v1730
    %v1736 = vsel %vm154, %v1724, %v1732
    %v1737 = vsel %vm154, %v1726, %v1718
    %v1738 = vsel %vm154, %v1728, %v1720
    %v1739 = vsel %vm154, %v1730, %v1722
    %v1740 = vsel %vm154, %v1732, %v1724
    %v1741 = vmul.f32 %v1737, %v164
    %v1742 = vmul.f32 %v1733, %v165
    %v1743 = vmul.f32 %v1738, %v164
    %v1744 = vmul.f32 %v1734, %v165
    %v1745 = vmul.f32 %v1739, %v164
    %v1746 = vmul.f32 %v1735, %v165
    %v1747 = vmul.f32 %v1740, %v164
    %v1748 = vmul.f32 %v1736, %v165
    %1749 = vrot.lane.b32.xlu0 %v1677, 15
    %v1750 = vpop.permute.xlu0 %1749
    %1751 = vrot.lane.b32.xlu0 %v1679, 15
    %v1752 = vpop.permute.xlu0 %1751
    %1753 = vrot.lane.b32.xlu0 %v1681, 15
    %v1754 = vpop.permute.xlu0 %1753
    %1755 = vrot.lane.b32.xlu0 %v1683, 15
    %v1756 = vpop.permute.xlu0 %1755
    %1757 = vrot.lane.b32.xlu0 %v1678, 15
    %v1758 = vpop.permute.xlu0 %1757
    %1759 = vrot.lane.b32.xlu0 %v1680, 15
    %v1760 = vpop.permute.xlu0 %1759
    %1761 = vrot.lane.b32.xlu0 %v1682, 15
    %v1762 = vpop.permute.xlu0 %1761
    %1763 = vrot.lane.b32.xlu0 %v1684, 15
    %v1764 = vpop.permute.xlu0 %1763
    %v1765 = vsel %vm192, %v1750, %v1758
    %v1766 = vsel %vm192, %v1752, %v1760
    %v1767 = vsel %vm192, %v1754, %v1762
    %v1768 = vsel %vm192, %v1756, %v1764
    %v1769 = vsel %vm192, %v1758, %v1750
    %v1770 = vsel %vm192, %v1760, %v1752
    %v1771 = vsel %vm192, %v1762, %v1754
    %v1772 = vsel %vm192, %v1764, %v1756
    %v1773 = vmul.f32 %v1769, %v202
    %v1774 = vmul.f32 %v1765, %v203
    %v1775 = vmul.f32 %v1770, %v202
    %v1776 = vmul.f32 %v1766, %v203
    %v1777 = vmul.f32 %v1771, %v202
    %v1778 = vmul.f32 %v1767, %v203
    %v1779 = vmul.f32 %v1772, %v202
    %v1780 = vmul.f32 %v1768, %v203
    %1781 = vrot.lane.b32.xlu0 %v1677, 1
    %v1782 = vpop.permute.xlu0 %1781
    %1783 = vrot.lane.b32.xlu0 %v1679, 1
    %v1784 = vpop.permute.xlu0 %1783
    %1785 = vrot.lane.b32.xlu0 %v1681, 1
    %v1786 = vpop.permute.xlu0 %1785
    %1787 = vrot.lane.b32.xlu0 %v1683, 1
    %v1788 = vpop.permute.xlu0 %1787
    %1789 = vrot.lane.b32.xlu0 %v1678, 1
    %v1790 = vpop.permute.xlu0 %1789
    %1791 = vrot.lane.b32.xlu0 %v1680, 1
    %v1792 = vpop.permute.xlu0 %1791
    %1793 = vrot.lane.b32.xlu0 %v1682, 1
    %v1794 = vpop.permute.xlu0 %1793
    %1795 = vrot.lane.b32.xlu0 %v1684, 1
    %v1796 = vpop.permute.xlu0 %1795
    %v1797 = vsel %vm230, %v1782, %v1790
    %v1798 = vsel %vm230, %v1784, %v1792
    %v1799 = vsel %vm230, %v1786, %v1794
    %v1800 = vsel %vm230, %v1788, %v1796
    %v1801 = vsel %vm230, %v1790, %v1782
    %v1802 = vsel %vm230, %v1792, %v1784
    %v1803 = vsel %vm230, %v1794, %v1786
    %v1804 = vsel %vm230, %v1796, %v1788
    %v1805 = vmul.f32 %v1801, %v240
    %v1806 = vmul.f32 %v1797, %v241
    %v1807 = vmul.f32 %v1802, %v240
    %v1808 = vmul.f32 %v1798, %v241
    %v1809 = vmul.f32 %v1803, %v240
    %v1810 = vmul.f32 %v1799, %v241
    %v1811 = vmul.f32 %v1804, %v240
    %v1812 = vmul.f32 %v1800, %v241
    %1813 = vrot.lane.b32.xlu0 %v1677, 127
    %v1814 = vpop.permute.xlu0 %1813
    %1815 = vrot.lane.b32.xlu0 %v1679, 127
    %v1816 = vpop.permute.xlu0 %1815
    %1817 = vrot.lane.b32.xlu0 %v1681, 127
    %v1818 = vpop.permute.xlu0 %1817
    %1819 = vrot.lane.b32.xlu0 %v1683, 127
    %v1820 = vpop.permute.xlu0 %1819
    %1821 = vrot.lane.b32.xlu0 %v1678, 127
    %v1822 = vpop.permute.xlu0 %1821
    %1823 = vrot.lane.b32.xlu0 %v1680, 127
    %v1824 = vpop.permute.xlu0 %1823
    %1825 = vrot.lane.b32.xlu0 %v1682, 127
    %v1826 = vpop.permute.xlu0 %1825
    %1827 = vrot.lane.b32.xlu0 %v1684, 127
    %v1828 = vpop.permute.xlu0 %1827
    %v1829 = vsel %vm268, %v1814, %v1822
    %v1830 = vsel %vm268, %v1816, %v1824
    %v1831 = vsel %vm268, %v1818, %v1826
    %v1832 = vsel %vm268, %v1820, %v1828
    %v1833 = vsel %vm268, %v1822, %v1814
    %v1834 = vsel %vm268, %v1824, %v1816
    %v1835 = vsel %vm268, %v1826, %v1818
    %v1836 = vsel %vm268, %v1828, %v1820
    %v1837 = vmul.f32 %v1829, %v278
    %v1838 = vmul.f32 %v1833, %v279
    %v1839 = vmul.f32 %v1830, %v278
    %v1840 = vmul.f32 %v1834, %v279
    %v1841 = vmul.f32 %v1831, %v278
    %v1842 = vmul.f32 %v1835, %v279
    %v1843 = vmul.f32 %v1832, %v278
    %v1844 = vmul.f32 %v1836, %v279
    %1845 = vrot.lane.b32.xlu0 %v1677, 113
    %v1846 = vpop.permute.xlu0 %1845
    %1847 = vrot.lane.b32.xlu0 %v1679, 113
    %v1848 = vpop.permute.xlu0 %1847
    %1849 = vrot.lane.b32.xlu0 %v1681, 113
    %v1850 = vpop.permute.xlu0 %1849
    %1851 = vrot.lane.b32.xlu0 %v1683, 113
    %v1852 = vpop.permute.xlu0 %1851
    %1853 = vrot.lane.b32.xlu0 %v1678, 113
    %v1854 = vpop.permute.xlu0 %1853
    %1855 = vrot.lane.b32.xlu0 %v1680, 113
    %v1856 = vpop.permute.xlu0 %1855
    %1857 = vrot.lane.b32.xlu0 %v1682, 113
    %v1858 = vpop.permute.xlu0 %1857
    %1859 = vrot.lane.b32.xlu0 %v1684, 113
    %v1860 = vpop.permute.xlu0 %1859
    %v1861 = vsel %vm306, %v1846, %v1854
    %v1862 = vsel %vm306, %v1848, %v1856
    %v1863 = vsel %vm306, %v1850, %v1858
    %v1864 = vsel %vm306, %v1852, %v1860
    %v1865 = vsel %vm306, %v1854, %v1846
    %v1866 = vsel %vm306, %v1856, %v1848
    %v1867 = vsel %vm306, %v1858, %v1850
    %v1868 = vsel %vm306, %v1860, %v1852
    %v1869 = vmul.f32 %v1861, %v316
    %v1870 = vmul.f32 %v1865, %v317
    %v1871 = vmul.f32 %v1862, %v316
    %v1872 = vmul.f32 %v1866, %v317
    %v1873 = vmul.f32 %v1863, %v316
    %v1874 = vmul.f32 %v1867, %v317
    %v1875 = vmul.f32 %v1864, %v316
    %v1876 = vmul.f32 %v1868, %v317
    %1877 = vrot.lane.b32.xlu0 %v1677, 112
    %v1878 = vpop.permute.xlu0 %1877
    %1879 = vrot.lane.b32.xlu0 %v1679, 112
    %v1880 = vpop.permute.xlu0 %1879
    %1881 = vrot.lane.b32.xlu0 %v1681, 112
    %v1882 = vpop.permute.xlu0 %1881
    %1883 = vrot.lane.b32.xlu0 %v1683, 112
    %v1884 = vpop.permute.xlu0 %1883
    %1885 = vrot.lane.b32.xlu0 %v1678, 112
    %v1886 = vpop.permute.xlu0 %1885
    %1887 = vrot.lane.b32.xlu0 %v1680, 112
    %v1888 = vpop.permute.xlu0 %1887
    %1889 = vrot.lane.b32.xlu0 %v1682, 112
    %v1890 = vpop.permute.xlu0 %1889
    %1891 = vrot.lane.b32.xlu0 %v1684, 112
    %v1892 = vpop.permute.xlu0 %1891
    %v1893 = vsel %vm344, %v1878, %v1886
    %v1894 = vsel %vm344, %v1880, %v1888
    %v1895 = vsel %vm344, %v1882, %v1890
    %v1896 = vsel %vm344, %v1884, %v1892
    %v1897 = vsel %vm344, %v1886, %v1878
    %v1898 = vsel %vm344, %v1888, %v1880
    %v1899 = vsel %vm344, %v1890, %v1882
    %v1900 = vsel %vm344, %v1892, %v1884
    %v1901 = vmul.f32 %v1893, %v354
    %v1902 = vmul.f32 %v1897, %v355
    %v1903 = vmul.f32 %v1894, %v354
    %v1904 = vmul.f32 %v1898, %v355
    %v1905 = vmul.f32 %v1895, %v354
    %v1906 = vmul.f32 %v1899, %v355
    %v1907 = vmul.f32 %v1896, %v354
    %v1908 = vmul.f32 %v1900, %v355
    %1909 = vrot.lane.b32.xlu0 %v1677, 111
    %v1910 = vpop.permute.xlu0 %1909
    %1911 = vrot.lane.b32.xlu0 %v1679, 111
    %v1912 = vpop.permute.xlu0 %1911
    %1913 = vrot.lane.b32.xlu0 %v1681, 111
    %v1914 = vpop.permute.xlu0 %1913
    %1915 = vrot.lane.b32.xlu0 %v1683, 111
    %v1916 = vpop.permute.xlu0 %1915
    %1917 = vrot.lane.b32.xlu0 %v1678, 111
    %v1918 = vpop.permute.xlu0 %1917
    %1919 = vrot.lane.b32.xlu0 %v1680, 111
    %v1920 = vpop.permute.xlu0 %1919
    %1921 = vrot.lane.b32.xlu0 %v1682, 111
    %v1922 = vpop.permute.xlu0 %1921
    %1923 = vrot.lane.b32.xlu0 %v1684, 111
    %v1924 = vpop.permute.xlu0 %1923
    %v1925 = vsel %vm382, %v1910, %v1918
    %v1926 = vsel %vm382, %v1912, %v1920
    %v1927 = vsel %vm382, %v1914, %v1922
    %v1928 = vsel %vm382, %v1916, %v1924
    %v1929 = vsel %vm382, %v1918, %v1910
    %v1930 = vsel %vm382, %v1920, %v1912
    %v1931 = vsel %vm382, %v1922, %v1914
    %v1932 = vsel %vm382, %v1924, %v1916
    %v1933 = vmul.f32 %v1925, %v392
    %v1934 = vmul.f32 %v1929, %v393
    %v1935 = vmul.f32 %v1926, %v392
    %v1936 = vmul.f32 %v1930, %v393
    %v1937 = vmul.f32 %v1927, %v392
    %v1938 = vmul.f32 %v1931, %v393
    %v1939 = vmul.f32 %v1928, %v392
    %v1940 = vmul.f32 %v1932, %v393
    %v1941 = vpack.c.bf16 %v1711, %v1709
    %v1942 = vpack.c.bf16 %v1712, %v1710
    %v1943 = vpack.c.bf16 %v1715, %v1713
    %v1944 = vpack.c.bf16 %v1716, %v1714
    %v1945 = vpack.c.bf16 %v1743, %v1741
    %v1946 = vpack.c.bf16 %v1744, %v1742
    %v1947 = vpack.c.bf16 %v1747, %v1745
    %v1948 = vpack.c.bf16 %v1748, %v1746
    %v1949 = vpack.c.bf16 %v1775, %v1773
    %v1950 = vpack.c.bf16 %v1776, %v1774
    %v1951 = vpack.c.bf16 %v1779, %v1777
    %v1952 = vpack.c.bf16 %v1780, %v1778
    %v1953 = vpack.c.bf16 %v1807, %v1805
    %v1954 = vpack.c.bf16 %v1808, %v1806
    %v1955 = vpack.c.bf16 %v1811, %v1809
    %v1956 = vpack.c.bf16 %v1812, %v1810
    %v1957 = vpack.c.bf16 %v1679, %v1677
    %v1958 = vpack.c.bf16 %v1680, %v1678
    %v1959 = vpack.c.bf16 %v1683, %v1681
    %v1960 = vpack.c.bf16 %v1684, %v1682
    %v1961 = vpack.c.bf16 %v1839, %v1837
    %v1962 = vpack.c.bf16 %v1840, %v1838
    %v1963 = vpack.c.bf16 %v1843, %v1841
    %v1964 = vpack.c.bf16 %v1844, %v1842
    %v1965 = vpack.c.bf16 %v1871, %v1869
    %v1966 = vpack.c.bf16 %v1872, %v1870
    %v1967 = vpack.c.bf16 %v1875, %v1873
    %v1968 = vpack.c.bf16 %v1876, %v1874
    %v1969 = vpack.c.bf16 %v1903, %v1901
    %v1970 = vpack.c.bf16 %v1904, %v1902
    %v1971 = vpack.c.bf16 %v1907, %v1905
    %v1972 = vpack.c.bf16 %v1908, %v1906
    %v1973 = vpack.c.bf16 %v1935, %v1933
    %v1974 = vpack.c.bf16 %v1936, %v1934
    %v1975 = vpack.c.bf16 %v1939, %v1937
    %v1976 = vpack.c.bf16 %v1940, %v1938
    %1977 = vmatpush.bf16.msra.mxu0 %v1955
    %1978 = vmatpush.bf16.msra.mxu0 %v1953
    %1979 = vmatpush.bf16.msra.mxu0 %v1951
    %1980 = vmatpush.bf16.msra.mxu0 %v1949
    %1981 = vmatpush.bf16.msra.mxu0 %v1947
    %1982 = vmatpush.bf16.msra.mxu0 %v1945
    %1983 = vmatpush.bf16.msra.mxu0 %v1943
    %1984 = vmatpush.bf16.msra.mxu0 %v1941
    %1985 = vmatmul.bf16.gmra.mxu0 %v948
    %v1986 = vpop.f32.mrf.mxu0
    %v1987 = vadd.f32 %v911, %v1986
    %v1988 = vpop.f32.mrf.mxu0
    %v1989 = vadd.f32 %v916, %v1988
    %1990 = vmatmul.bf16.gmra.mxu0 %v951
    %v1991 = vpop.f32.mrf.mxu0
    %v1992 = vadd.f32 %v921, %v1991
    %v1993 = vpop.f32.mrf.mxu0
    %v1994 = vadd.f32 %v926, %v1993
    %1995 = vdwg.mxu0
    %1996 = vmatpush.bf16.msra.mxu0 %v1971
    %1997 = vmatpush.bf16.msra.mxu0 %v1969
    %1998 = vmatpush.bf16.msra.mxu0 %v1967
    %1999 = vmatpush.bf16.msra.mxu0 %v1965
    %2000 = vmatpush.bf16.msra.mxu0 %v1963
    %2001 = vmatpush.bf16.msra.mxu0 %v1961
    %2002 = vmatpush.bf16.msra.mxu0 %v1959
    %2003 = vmatpush.bf16.msra.mxu0 %v1957
    %2004 = vmatmul.bf16.gmra.mxu0 %v949
    %v2005 = vpop.f32.mrf.mxu0
    %v2006 = vadd.f32 %v1987, %v2005
    %v2007 = vpop.f32.mrf.mxu0
    %v2008 = vadd.f32 %v1989, %v2007
    %2009 = vmatmul.bf16.gmra.mxu0 %v952
    %v2010 = vpop.f32.mrf.mxu0
    %v2011 = vadd.f32 %v1992, %v2010
    %v2012 = vpop.f32.mrf.mxu0
    %v2013 = vadd.f32 %v1994, %v2012
    %2014 = vdwg.mxu0
    %2015 = vmatpush.bf16.msra.mxu0 0
    %2016 = vmatpush.bf16.msra.mxu0 0
    %2017 = vmatpush.bf16.msra.mxu0 0
    %2018 = vmatpush.bf16.msra.mxu0 0
    %2019 = vmatpush.bf16.msra.mxu0 0
    %2020 = vmatpush.bf16.msra.mxu0 0
    %2021 = vmatpush.bf16.msra.mxu0 %v1975
    %2022 = vmatpush.bf16.msra.mxu0 %v1973
    %2023 = vmatmul.bf16.gmra.mxu0 %v959
    %v2024 = vpop.f32.mrf.mxu0
    %v2025 = vadd.f32 %v2006, %v2024
    %v2026 = vpop.f32.mrf.mxu0
    %v2027 = vadd.f32 %v2008, %v2026
    %2028 = vmatmul.bf16.gmra.mxu0 %v962
    %v2029 = vpop.f32.mrf.mxu0
    %v2030 = vadd.f32 %v2011, %v2029
    %v2031 = vpop.f32.mrf.mxu0
    %v2032 = vadd.f32 %v2013, %v2031
    %2033 = vdwg.mxu0
    %2034 = vmatpush.bf16.msra.mxu0 %v1956
    %2035 = vmatpush.bf16.msra.mxu0 %v1954
    %2036 = vmatpush.bf16.msra.mxu0 %v1952
    %2037 = vmatpush.bf16.msra.mxu0 %v1950
    %2038 = vmatpush.bf16.msra.mxu0 %v1948
    %2039 = vmatpush.bf16.msra.mxu0 %v1946
    %2040 = vmatpush.bf16.msra.mxu0 %v1944
    %2041 = vmatpush.bf16.msra.mxu0 %v1942
    %2042 = vmatmul.bf16.gmra.mxu0 %v948
    %v2043 = vpop.f32.mrf.mxu0
    %v2044 = vadd.f32 %v911, %v2043
    %v2045 = vpop.f32.mrf.mxu0
    %v2046 = vadd.f32 %v916, %v2045
    %2047 = vmatmul.bf16.gmra.mxu0 %v951
    %v2048 = vpop.f32.mrf.mxu0
    %v2049 = vadd.f32 %v921, %v2048
    %v2050 = vpop.f32.mrf.mxu0
    %v2051 = vadd.f32 %v926, %v2050
    %2052 = vdwg.mxu0
    %2053 = vmatpush.bf16.msra.mxu0 %v1972
    %2054 = vmatpush.bf16.msra.mxu0 %v1970
    %2055 = vmatpush.bf16.msra.mxu0 %v1968
    %2056 = vmatpush.bf16.msra.mxu0 %v1966
    %2057 = vmatpush.bf16.msra.mxu0 %v1964
    %2058 = vmatpush.bf16.msra.mxu0 %v1962
    %2059 = vmatpush.bf16.msra.mxu0 %v1960
    %2060 = vmatpush.bf16.msra.mxu0 %v1958
    %2061 = vmatmul.bf16.gmra.mxu0 %v949
    %v2062 = vpop.f32.mrf.mxu0
    %v2063 = vadd.f32 %v2044, %v2062
    %v2064 = vpop.f32.mrf.mxu0
    %v2065 = vadd.f32 %v2046, %v2064
    %2066 = vmatmul.bf16.gmra.mxu0 %v952
    %v2067 = vpop.f32.mrf.mxu0
    %v2068 = vadd.f32 %v2049, %v2067
    %v2069 = vpop.f32.mrf.mxu0
    %v2070 = vadd.f32 %v2051, %v2069
    %2071 = vdwg.mxu0
    %2072 = vmatpush.bf16.msra.mxu0 0
    %2073 = vmatpush.bf16.msra.mxu0 0
    %2074 = vmatpush.bf16.msra.mxu0 0
    %2075 = vmatpush.bf16.msra.mxu0 0
    %2076 = vmatpush.bf16.msra.mxu0 0
    %2077 = vmatpush.bf16.msra.mxu0 0
    %2078 = vmatpush.bf16.msra.mxu0 %v1976
    %2079 = vmatpush.bf16.msra.mxu0 %v1974
    %2080 = vmatmul.bf16.gmra.mxu0 %v959
    %v2081 = vpop.f32.mrf.mxu0
    %v2082 = vadd.f32 %v2063, %v2081
    %v2083 = vpop.f32.mrf.mxu0
    %v2084 = vadd.f32 %v2065, %v2083
    %2085 = vmatmul.bf16.gmra.mxu0 %v962
    %v2086 = vpop.f32.mrf.mxu0
    %v2087 = vadd.f32 %v2068, %v2086
    %v2088 = vpop.f32.mrf.mxu0
    %v2089 = vadd.f32 %v2070, %v2088
    %2090 = vdwg.mxu0
    %v2091 = vadd.f32 %v2025, %v2082
    %2092 = vadd.xlane.f32.xlu0 %v2091
    %v2093 = vpop.xlane.xlu0 %2092
    %v2094 = vadd.f32 %v2027, %v2084
    %2095 = vadd.xlane.f32.xlu0 %v2094
    %v2096 = vpop.xlane.xlu0 %2095
    %v2097 = vadd.f32 %v2030, %v2087
    %2098 = vadd.xlane.f32.xlu0 %v2097
    %v2099 = vpop.xlane.xlu0 %2098
    %v2100 = vadd.f32 %v2032, %v2089
    %2101 = vadd.xlane.f32.xlu0 %v2100
    %v2102 = vpop.xlane.xlu0 %2101
    %v2103 = vmul.f32 %v2093, %v1096
    %v2104 = vmul.f32 %v2096, %v1096
    %v2105 = vmul.f32 %v2099, %v1096
    %v2106 = vmul.f32 %v2102, %v1096
    %v2107 = vld [vmem:[%s6] sm:$0xff]
    %v2108 = vld [vmem:[%s6 + $0x8] sm:$0xff]
    %v2109 = vld [vmem:[%s6 + $0x10] sm:$0xff]
    %v2110 = vld [vmem:[%s6 + $0x18] sm:$0xff]
    %v2111 = vmul.f32 %v2107, %v2103
    %v2112 = vmul.f32 %v2108, %v2104
    %v2113 = vmul.f32 %v2109, %v2105
    %v2114 = vmul.f32 %v2110, %v2106
    %v2115 = vsel %vm1109, %v2111, 0.0
    %v2116 = vsel %vm1109, %v2112, 0.0
    %v2117 = vadd.f32 %v2115, %v2116
    %v2118 = vsel %vm1109, %v2113, 0.0
    %v2119 = vadd.f32 %v2117, %v2118
    %v2120 = vsel %vm1109, %v2114, 0.0
    %v2121 = vadd.f32 %v2119, %v2120
    %v2122 = vrot.slane %v2121, 4
    %v2123 = vadd.f32 %v2121, %v2122
    %v2124 = vrot.slane %v2123, 2
    %v2125 = vadd.f32 %v2123, %v2124
    %v2126 = vrot.slane %v2125, 1
    %v2127 = vadd.f32 %v2125, %v2126
    %v2128 = vld [vmem:[%s7] sm:$0x1]
    %v2129 = vadd.f32 %v2127, %v2128
    %vm2130 = vcmp.ge.f32.partialorder %v2129, 0.0
    %v2131 = vmul.f32 %v1126, %v2129
    %v2132 = vsel %vm2130, %v2129, %v2131
    %v2133 = vld [vmem:[%s8] sm:$0xff]
    %v2134 = vld [vmem:[%s8 + $0x8] sm:$0xff]
    %v2135 = vld [vmem:[%s8 + $0x10] sm:$0xff]
    %v2136 = vld [vmem:[%s8 + $0x18] sm:$0xff]
    %v2137 = vperm.slane %v2132, 0
    %v2138 = vmul.f32 %v2133, %v2137
    %v2139 = vmul.f32 %v2134, %v2137
    %v2140 = vmul.f32 %v2135, %v2137
    %v2141 = vmul.f32 %v2136, %v2137
    %v2142 = vsel %vm1109, %v2138, 0.0
    %2143 = vadd.xlane.f32.xlu0 %v2142
    %v2144 = vpop.xlane.xlu0 %2143
    %v2145 = vsel %vm1109, %v2139, 0.0
    %2146 = vadd.xlane.f32.xlu0 %v2145
    %v2147 = vpop.xlane.xlu0 %2146
    %v2148 = vsel %vm1109, %v2140, 0.0
    %2149 = vadd.xlane.f32.xlu0 %v2148
    %v2150 = vpop.xlane.xlu0 %2149
    %v2151 = vsel %vm1109, %v2141, 0.0
    %2152 = vadd.xlane.f32.xlu0 %v2151
    %v2153 = vpop.xlane.xlu0 %2152
    %v2154 = vld [vmem:[%s9] sm:$0xff]
    %v2155 = vld [vmem:[%s9 + $0x8] sm:$0xff]
    %v2156 = vld [vmem:[%s9 + $0x10] sm:$0xff]
    %v2157 = vld [vmem:[%s9 + $0x18] sm:$0xff]
    %v2158 = vadd.f32 %v2144, %v2154
    %v2159 = vadd.f32 %v2147, %v2155
    %v2160 = vadd.f32 %v2150, %v2156
    %v2161 = vadd.f32 %v2153, %v2157
    %v2162 = vsub.f32 0.0, %v2158
    %v2163 = vsub.f32 0.0, %v2159
    %v2164 = vsub.f32 0.0, %v2160
    %v2165 = vsub.f32 0.0, %v2161
    %v2166 = vmul.f32 %v2162, 1.442695
    %v2167 = vpow.pop %v2166
    %v2168 = vmul.f32 %v2163, 1.442695
    %v2169 = vpow.pop %v2168
    %v2170 = vmul.f32 %v2164, 1.442695
    %v2171 = vpow.pop %v2170
    %v2172 = vmul.f32 %v2165, 1.442695
    %v2173 = vpow.pop %v2172
    %v2174 = vadd.f32 %v2167, 1.0
    %v2175 = vadd.f32 %v2169, 1.0
    %v2176 = vadd.f32 %v2171, 1.0
    %v2177 = vadd.f32 %v2173, 1.0
    %v2178 = vrcp.pop %v2174
    %v2179 = vrcp.pop %v2175
    %v2180 = vrcp.pop %v2176
    %v2181 = vrcp.pop %v2177
    %2183 = vset.pattern.permute.xlu0 0
    %2184 = vperm.xlu0 %2183, %v2178
    %v2185 = vpop.permute.xlu0 %2184
    %2188 = vset.pattern.permute.xlu0 0
    %2189 = vperm.xlu0 %2188, %v2179
    %v2190 = vpop.permute.xlu0 %2189
    %2193 = vset.pattern.permute.xlu0 0
    %2194 = vperm.xlu0 %2193, %v2180
    %v2195 = vpop.permute.xlu0 %2194
    %2198 = vset.pattern.permute.xlu0 0
    %2199 = vperm.xlu0 %2198, %v2181
    %v2200 = vpop.permute.xlu0 %2199
    %v2202 = vmul.f32 %v2025, %v2185
    %v2203 = vmul.f32 %v2082, %v2185
    %v2204 = vmul.f32 %v2027, %v2190
    %v2205 = vmul.f32 %v2084, %v2190
    %v2206 = vmul.f32 %v2030, %v2195
    %v2207 = vmul.f32 %v2087, %v2195
    %v2208 = vmul.f32 %v2032, %v2200
    %v2209 = vmul.f32 %v2089, %v2200
    %v2210 = vadd.f32 %v2202, %v1247
    %v2211 = vadd.f32 %v2203, %v1248
    %v2212 = vadd.f32 %v2204, %v1249
    %v2213 = vadd.f32 %v2205, %v1250
    %v2214 = vadd.f32 %v2206, %v1251
    %v2215 = vadd.f32 %v2207, %v1252
    %v2216 = vadd.f32 %v2208, %v1253
    %v2217 = vadd.f32 %v2209, %v1254
    %vm2218 = vcmp.ge.f32.partialorder %v2210, 0.0
    %vm2219 = vcmp.ge.f32.partialorder %v2211, 0.0
    %vm2220 = vcmp.ge.f32.partialorder %v2212, 0.0
    %vm2221 = vcmp.ge.f32.partialorder %v2213, 0.0
    %vm2222 = vcmp.ge.f32.partialorder %v2214, 0.0
    %vm2223 = vcmp.ge.f32.partialorder %v2215, 0.0
    %vm2224 = vcmp.ge.f32.partialorder %v2216, 0.0
    %vm2225 = vcmp.ge.f32.partialorder %v2217, 0.0
    %v2226 = vmul.f32 %v599, %v2210
    %v2227 = vmul.f32 %v599, %v2211
    %v2228 = vmul.f32 %v599, %v2212
    %v2229 = vmul.f32 %v599, %v2213
    %v2230 = vmul.f32 %v599, %v2214
    %v2231 = vmul.f32 %v599, %v2215
    %v2232 = vmul.f32 %v599, %v2216
    %v2233 = vmul.f32 %v599, %v2217
    %v2234 = vsel %vm2218, %v2210, %v2226
    %v2235 = vsel %vm2219, %v2211, %v2227
    %v2236 = vsel %vm2220, %v2212, %v2228
    %v2237 = vsel %vm2221, %v2213, %v2229
    %v2238 = vsel %vm2222, %v2214, %v2230
    %v2239 = vsel %vm2223, %v2215, %v2231
    %v2240 = vsel %vm2224, %v2216, %v2232
    %v2241 = vsel %vm2225, %v2217, %v2233
    %s2242 = scalar_lea.vmem %s11, 64
    %2243 = vst [vmem:[%s2242] sm:$0xff] %v2234
    %2244 = vst [vmem:[%s2242 + $0x8] sm:$0xff] %v2235
    %2245 = vst [vmem:[%s2242 + $0x10] sm:$0xff] %v2236
    %2246 = vst [vmem:[%s2242 + $0x18] sm:$0xff] %v2237
    %2247 = vst [vmem:[%s2242 + $0x20] sm:$0xff] %v2238
    %2248 = vst [vmem:[%s2242 + $0x28] sm:$0xff] %v2239
    %2249 = vst [vmem:[%s2242 + $0x30] sm:$0xff] %v2240
    %2250 = vst [vmem:[%s2242 + $0x38] sm:$0xff] %v2241
    // Predicated region
    $region50: #{irblock_forward.1} parent=1 // pred_check
      _
    $region51: #{irblock_forward.1} parent=1 // pred_check_branch
      %2252 = sbr.rel (0) target = $region53
    $region52: #{irblock_forward.1} parent=1 // pred_region
      _
    $region53: #{irblock_forward.1} parent=1 // pred_fallthru
      _
    // Predicated region
    $region54: #{irblock_forward.1} parent=1 // pred_check
      _
    $region55: #{irblock_forward.1} parent=1 // pred_check_branch
      %2254 = sbr.rel (0) target = $region57
    $region56: #{irblock_forward.1} parent=1 // pred_region
      _
    $region57: #{irblock_forward.1} parent=1 // pred_fallthru
      _
    %2255 = vsyncpa [#allocation3], 1

</llo_original>
